<compile_context>
chip_gen: v6e
topology: v6e:2x2x1
jax: 0.10.0
libtpu: 0.0.40
codegen_flags: <defaults>
</compile_context>

<pallas_src>
import jax
import jax.numpy as jnp
from jax.experimental import pallas as pl
from jax.experimental.pallas import tpu as pltpu


def _make_kernel(kernel_size: int, pad: int):
    K = kernel_size

    def kernel(w_ref, x_ref, o_ref, red_ref):
        # w_ref   : SMEM (2*K*K + 1,) f32   [w_max taps | (w_avg / C) taps | bias]
        # x_ref   : VMEM (1, Ct, H, W) f32  unpadded input channel-tile
        # o_ref   : VMEM (1, 1, H, W) f32   attention map for this batch element
        # red_ref : VMEM (2, Hp, Wp) f32    running [channel-max ; channel-sum],
        #                                   zero border == conv zero padding
        c = pl.program_id(1)
        n_c = pl.num_programs(1)
        H = o_ref.shape[2]
        W = o_ref.shape[3]

        x = x_ref[0]                      # (Ct, H, W)
        mx_t = jnp.max(x, axis=0)         # (H, W) partial channel max
        sm_t = jnp.sum(x, axis=0)         # (H, W) partial channel sum

        @pl.when(c == 0)
        def _init():
            # Zero the whole scratch (border zeros == conv zero padding), then
            # write the first partial reduction into the interior.
            red_ref[...] = jnp.zeros_like(red_ref)
            red_ref[0, pad:pad + H, pad:pad + W] = mx_t
            red_ref[1, pad:pad + H, pad:pad + W] = sm_t

        @pl.when(c > 0)
        def _accumulate():
            red_ref[0, pad:pad + H, pad:pad + W] = jnp.maximum(
                red_ref[0, pad:pad + H, pad:pad + W], mx_t)
            red_ref[1, pad:pad + H, pad:pad + W] = (
                red_ref[1, pad:pad + H, pad:pad + W] + sm_t)

        @pl.when(c == n_c - 1)
        def _finalize():
            red_mx = red_ref[0]           # (Hp, Wp), loaded once
            red_av = red_ref[1]           # (Hp, Wp), loaded once
            acc = jnp.full((H, W), w_ref[2 * K * K], dtype=jnp.float32)  # bias
            # Hoist lane-direction (kw) shifts out of the kh loop: 2*K lane
            # slices total; inner loop is sublane slices + VALU multiply-adds.
            for kw in range(K):
                sh_mx = red_mx[:, kw:kw + W]     # (Hp, W)
                sh_av = red_av[:, kw:kw + W]     # (Hp, W)
                for kh in range(K):
                    acc = (acc
                           + w_ref[kh * K + kw] * sh_mx[kh:kh + H, :]
                           + w_ref[K * K + kh * K + kw] * sh_av[kh:kh + H, :])
            o_ref[0, 0] = jax.nn.sigmoid(acc)

    return kernel


def _pick_channel_tile(C, H, W, budget_bytes=8 << 20):
    """Largest divisor of C whose double-buffered (Ct, H, W) f32 block fits budget."""
    cap = max(1, budget_bytes // (2 * H * W * 4))
    ct = 1
    for d in range(1, C + 1):
        if C % d == 0 and d <= cap:
            ct = d
    return ct


def spatial_attention(x, weight, bias, kernel_size=7):
    """x: (B, C, H, W) f32, weight: (1, 2, K, K), bias: (1,) -> (B, 1, H, W)."""
    B, C, H, W = x.shape
    K = kernel_size
    pad = K // 2
    Hp, Wp = H + 2 * pad, W + 2 * pad

    x = x.astype(jnp.float32)

    # Fold the 1/C of the channel mean into the avg-branch weights so the
    # kernel keeps a running channel *sum*.  Layout: [w_max taps, w_avg taps, bias].
    w_flat = jnp.concatenate(
        [weight[0, 0].reshape(-1),
         (weight[0, 1] / C).reshape(-1),
         bias.reshape(-1)]
    ).astype(jnp.float32)

    Ct = _pick_channel_tile(C, H, W)
    n_c = C // Ct

    # Size scoped VMEM explicitly: double-buffered input + output blocks,
    # the reduced-map scratch, plus headroom.
    in_block_bytes = Ct * H * W * 4
    out_block_bytes = H * W * 4
    scratch_bytes = 2 * Hp * Wp * 4
    vmem_need = 2 * (in_block_bytes + out_block_bytes) + scratch_bytes + (2 << 20)
    vmem_limit = int(min(max(vmem_need, 16 << 20), 64 << 20))

    kernel = _make_kernel(K, pad)

    out = pl.pallas_call(
        kernel,
        out_shape=jax.ShapeDtypeStruct((B, 1, H, W), jnp.float32),
        grid=(B, n_c),
        in_specs=[
            pl.BlockSpec(memory_space=pltpu.MemorySpace.SMEM),            # params
            pl.BlockSpec((1, Ct, H, W), lambda b, c: (b, c, 0, 0)),        # x tile
        ],
        out_specs=pl.BlockSpec((1, 1, H, W), lambda b, c: (b, 0, 0, 0)),
        scratch_shapes=[
            pltpu.VMEM((2, Hp, Wp), jnp.float32),   # running [max ; sum], padded
        ],
        compiler_params=pltpu.CompilerParams(
            dimension_semantics=("parallel", "arbitrary"),
            vmem_limit_bytes=vmem_limit,
        ),
    )(w_flat, x)
    return out


if __name__ == "__main__":
    key = jax.random.PRNGKey(0)
    k1, k2, k3 = jax.random.split(key, 3)

    B, C, H, W = 2, 4, 16, 16
    ksize = 7

    x = jax.random.normal(k1, (B, C, H, W), dtype=jnp.float32)

    # Deterministic Conv2d(2, 1, 7) parameter init (kaiming-uniform-like bounds).
    fan_in = 2 * ksize * ksize
    bound = 1.0 / (fan_in ** 0.5)
    weight = jax.random.uniform(k2, (1, 2, ksize, ksize), jnp.float32, -bound, bound)
    bias = jax.random.uniform(k3, (1,), jnp.float32, -bound, bound)

    out = spatial_attention(x, weight, bias, ksize)
    out = jax.block_until_ready(out)

    # Pure-JAX reference (same semantics as the PyTorch forward).
    mx = jnp.max(x, axis=1, keepdims=True)
    av = jnp.mean(x, axis=1, keepdims=True)
    r = jnp.concatenate([mx, av], axis=1)
    ref = jax.lax.conv_general_dilated(
        r, weight, window_strides=(1, 1),
        padding=[(ksize // 2, ksize // 2), (ksize // 2, ksize // 2)],
        dimension_numbers=("NCHW", "OIHW", "NCHW"),
    ) + bias.reshape(1, 1, 1, 1)
    ref = jax.nn.sigmoid(ref)

    assert out.shape == (B, 1, H, W)
    assert jnp.allclose(out, ref, atol=1e-5, rtol=1e-5)
    print("KERNEL_OK")
</pallas_src>

<mosaic_0001>
module attributes {stable_mosaic.version = 11 : i64} {
  func.func @kernel(%arg0: i32, %arg1: i32, %arg2: memref<99xf32, #tpu.memory_space<smem>>, %arg3: memref<1x4x16x16xf32, #tpu.memory_space<vmem>>, %arg4: memref<1x1x16x16xf32, #tpu.memory_space<vmem>>, %arg5: memref<2x22x22xf32, #tpu.memory_space<vmem>>) attributes {dimension_semantics = [#tpu.dimension_semantics<parallel>, #tpu.dimension_semantics<arbitrary>], iteration_bounds = array<i64: 2, 1>, scalar_prefetch = 0 : i64, scratch_operands = 1 : i64, tpu.core_type = #tpu.core_type<tc>, window_params = [{transform_indices = @transform_0, window_bounds = array<i64: 99>}, {transform_indices = @transform_1, window_bounds = array<i64: 1, 4, 16, 16>}, {transform_indices = @transform_2, window_bounds = array<i64: 1, 1, 16, 16>}]} {
    %c0 = arith.constant 0 : index
    %c0_0 = arith.constant 0 : index
    %c0_1 = arith.constant 0 : index
    %c0_2 = arith.constant 0 : index
    %0 = vector.load %arg3[%c0, %c0_0, %c0_1, %c0_2] : memref<1x4x16x16xf32, #tpu.memory_space<vmem>>, vector<1x4x16x16xf32>
    %1 = vector.shape_cast %0 : vector<1x4x16x16xf32> to vector<4x16x16xf32>
    %cst = arith.constant dense<0xFF800000> : vector<16x16xf32>
    %2 = vector.multi_reduction <maximumf>, %1, %cst [0] : vector<4x16x16xf32> to vector<16x16xf32>
    %cst_3 = arith.constant dense<0.000000e+00> : vector<16x16xf32>
    %3 = vector.multi_reduction <add>, %1, %cst_3 [0] : vector<4x16x16xf32> to vector<16x16xf32>
    %c0_i32 = arith.constant 0 : i32
    %4 = arith.cmpi eq, %arg1, %c0_i32 : i32
    %5 = arith.extui %4 : i1 to i32
    %c0_i32_4 = arith.constant 0 : i32
    %6 = arith.cmpi ne, %5, %c0_i32_4 : i32
    scf.if %6 {
      %cst_9 = arith.constant 0.000000e+00 : f32
      %13 = vector.broadcast %cst_9 : f32 to vector<2x22x22xf32>
      %c0_10 = arith.constant 0 : index
      %c0_11 = arith.constant 0 : index
      %c0_12 = arith.constant 0 : index
      %14 = vector.load %arg5[%c0_10, %c0_11, %c0_12] : memref<2x22x22xf32, #tpu.memory_space<vmem>>, vector<2x22x22xf32>
      tpu.vector_store %arg5[%c0_10, %c0_11, %c0_12], %13 {strides = array<i32>} : memref<2x22x22xf32, #tpu.memory_space<vmem>>, vector<2x22x22xf32>,
      %c0_13 = arith.constant 0 : index
      %c3 = arith.constant 3 : index
      %c3_14 = arith.constant 3 : index
      %15 = vector.load %arg5[%c0_13, %c3, %c3_14] : memref<2x22x22xf32, #tpu.memory_space<vmem>>, vector<1x16x16xf32>
      %16 = vector.shape_cast %15 : vector<1x16x16xf32> to vector<16x16xf32>
      %17 = vector.shape_cast %2 : vector<16x16xf32> to vector<1x16x16xf32>
      tpu.vector_store %arg5[%c0_13, %c3, %c3_14], %17 {strides = array<i32>} : memref<2x22x22xf32, #tpu.memory_space<vmem>>, vector<1x16x16xf32>,
      %c1 = arith.constant 1 : index
      %c3_15 = arith.constant 3 : index
      %c3_16 = arith.constant 3 : index
      %18 = vector.load %arg5[%c1, %c3_15, %c3_16] : memref<2x22x22xf32, #tpu.memory_space<vmem>>, vector<1x16x16xf32>
      %19 = vector.shape_cast %18 : vector<1x16x16xf32> to vector<16x16xf32>
      %20 = vector.shape_cast %3 : vector<16x16xf32> to vector<1x16x16xf32>
      tpu.vector_store %arg5[%c1, %c3_15, %c3_16], %20 {strides = array<i32>} : memref<2x22x22xf32, #tpu.memory_space<vmem>>, vector<1x16x16xf32>,
    } else {
    }
    %c0_i32_5 = arith.constant 0 : i32
    %7 = arith.cmpi sgt, %arg1, %c0_i32_5 : i32
    %8 = arith.extui %7 : i1 to i32
    %c0_i32_6 = arith.constant 0 : i32
    %9 = arith.cmpi ne, %8, %c0_i32_6 : i32
    scf.if %9 {
      %c0_9 = arith.constant 0 : index
      %c3 = arith.constant 3 : index
      %c3_10 = arith.constant 3 : index
      %13 = vector.load %arg5[%c0_9, %c3, %c3_10] : memref<2x22x22xf32, #tpu.memory_space<vmem>>, vector<1x16x16xf32>
      %14 = vector.shape_cast %13 : vector<1x16x16xf32> to vector<16x16xf32>
      %15 = arith.maximumf %14, %2 : vector<16x16xf32>
      %c0_11 = arith.constant 0 : index
      %c3_12 = arith.constant 3 : index
      %c3_13 = arith.constant 3 : index
      %16 = vector.load %arg5[%c0_11, %c3_12, %c3_13] : memref<2x22x22xf32, #tpu.memory_space<vmem>>, vector<1x16x16xf32>
      %17 = vector.shape_cast %16 : vector<1x16x16xf32> to vector<16x16xf32>
      %18 = vector.shape_cast %15 : vector<16x16xf32> to vector<1x16x16xf32>
      tpu.vector_store %arg5[%c0_11, %c3_12, %c3_13], %18 {strides = array<i32>} : memref<2x22x22xf32, #tpu.memory_space<vmem>>, vector<1x16x16xf32>,
      %c1 = arith.constant 1 : index
      %c3_14 = arith.constant 3 : index
      %c3_15 = arith.constant 3 : index
      %19 = vector.load %arg5[%c1, %c3_14, %c3_15] : memref<2x22x22xf32, #tpu.memory_space<vmem>>, vector<1x16x16xf32>
      %20 = vector.shape_cast %19 : vector<1x16x16xf32> to vector<16x16xf32>
      %21 = arith.addf %20, %3 : vector<16x16xf32>
      %c1_16 = arith.constant 1 : index
      %c3_17 = arith.constant 3 : index
      %c3_18 = arith.constant 3 : index
      %22 = vector.load %arg5[%c1_16, %c3_17, %c3_18] : memref<2x22x22xf32, #tpu.memory_space<vmem>>, vector<1x16x16xf32>
      %23 = vector.shape_cast %22 : vector<1x16x16xf32> to vector<16x16xf32>
      %24 = vector.shape_cast %21 : vector<16x16xf32> to vector<1x16x16xf32>
      tpu.vector_store %arg5[%c1_16, %c3_17, %c3_18], %24 {strides = array<i32>} : memref<2x22x22xf32, #tpu.memory_space<vmem>>, vector<1x16x16xf32>,
    } else {
    }
    %c0_i32_7 = arith.constant 0 : i32
    %10 = arith.cmpi eq, %arg1, %c0_i32_7 : i32
    %11 = arith.extui %10 : i1 to i32
    %c0_i32_8 = arith.constant 0 : i32
    %12 = arith.cmpi ne, %11, %c0_i32_8 : i32
    scf.if %12 {
      %c0_9 = arith.constant 0 : index
      %c0_10 = arith.constant 0 : index
      %c0_11 = arith.constant 0 : index
      %13 = vector.load %arg5[%c0_9, %c0_10, %c0_11] : memref<2x22x22xf32, #tpu.memory_space<vmem>>, vector<1x22x22xf32>
      %14 = vector.shape_cast %13 : vector<1x22x22xf32> to vector<22x22xf32>
      %c1 = arith.constant 1 : index
      %c0_12 = arith.constant 0 : index
      %c0_13 = arith.constant 0 : index
      %15 = vector.load %arg5[%c1, %c0_12, %c0_13] : memref<2x22x22xf32, #tpu.memory_space<vmem>>, vector<1x22x22xf32>
      %16 = vector.shape_cast %15 : vector<1x22x22xf32> to vector<22x22xf32>
      %c98 = arith.constant 98 : index
      %17 = memref.load %arg2[%c98] : memref<99xf32, #tpu.memory_space<smem>>
      %18 = vector.broadcast %17 : f32 to vector<16x16xf32>
      %19 = vector.extract_strided_slice %14 {offsets = [0, 0], sizes = [22, 16], strides = [1, 1]} : vector<22x22xf32> to vector<22x16xf32>
      %20 = vector.extract_strided_slice %16 {offsets = [0, 0], sizes = [22, 16], strides = [1, 1]} : vector<22x22xf32> to vector<22x16xf32>
      %c0_14 = arith.constant 0 : index
      %21 = memref.load %arg2[%c0_14] : memref<99xf32, #tpu.memory_space<smem>>
      %22 = vector.extract_strided_slice %19 {offsets = [0, 0], sizes = [16, 16], strides = [1, 1]} : vector<22x16xf32> to vector<16x16xf32>
      %23 = vector.broadcast %21 : f32 to vector<16x16xf32>
      %24 = arith.mulf %23, %22 : vector<16x16xf32>
      %25 = arith.addf %18, %24 : vector<16x16xf32>
      %c49 = arith.constant 49 : index
      %26 = memref.load %arg2[%c49] : memref<99xf32, #tpu.memory_space<smem>>
      %27 = vector.extract_strided_slice %20 {offsets = [0, 0], sizes = [16, 16], strides = [1, 1]} : vector<22x16xf32> to vector<16x16xf32>
      %28 = vector.broadcast %26 : f32 to vector<16x16xf32>
      %29 = arith.mulf %28, %27 : vector<16x16xf32>
      %30 = arith.addf %25, %29 : vector<16x16xf32>
      %c7 = arith.constant 7 : index
      %31 = memref.load %arg2[%c7] : memref<99xf32, #tpu.memory_space<smem>>
      %32 = vector.extract_strided_slice %19 {offsets = [1, 0], sizes = [16, 16], strides = [1, 1]} : vector<22x16xf32> to vector<16x16xf32>
      %33 = vector.broadcast %31 : f32 to vector<16x16xf32>
      %34 = arith.mulf %33, %32 : vector<16x16xf32>
      %35 = arith.addf %30, %34 : vector<16x16xf32>
      %c56 = arith.constant 56 : index
      %36 = memref.load %arg2[%c56] : memref<99xf32, #tpu.memory_space<smem>>
      %37 = vector.extract_strided_slice %20 {offsets = [1, 0], sizes = [16, 16], strides = [1, 1]} : vector<22x16xf32> to vector<16x16xf32>
      %38 = vector.broadcast %36 : f32 to vector<16x16xf32>
      %39 = arith.mulf %38, %37 : vector<16x16xf32>
      %40 = arith.addf %35, %39 : vector<16x16xf32>
      %c14 = arith.constant 14 : index
      %41 = memref.load %arg2[%c14] : memref<99xf32, #tpu.memory_space<smem>>
      %42 = vector.extract_strided_slice %19 {offsets = [2, 0], sizes = [16, 16], strides = [1, 1]} : vector<22x16xf32> to vector<16x16xf32>
      %43 = vector.broadcast %41 : f32 to vector<16x16xf32>
      %44 = arith.mulf %43, %42 : vector<16x16xf32>
      %45 = arith.addf %40, %44 : vector<16x16xf32>
      %c63 = arith.constant 63 : index
      %46 = memref.load %arg2[%c63] : memref<99xf32, #tpu.memory_space<smem>>
      %47 = vector.extract_strided_slice %20 {offsets = [2, 0], sizes = [16, 16], strides = [1, 1]} : vector<22x16xf32> to vector<16x16xf32>
      %48 = vector.broadcast %46 : f32 to vector<16x16xf32>
      %49 = arith.mulf %48, %47 : vector<16x16xf32>
      %50 = arith.addf %45, %49 : vector<16x16xf32>
      %c21 = arith.constant 21 : index
      %51 = memref.load %arg2[%c21] : memref<99xf32, #tpu.memory_space<smem>>
      %52 = vector.extract_strided_slice %19 {offsets = [3, 0], sizes = [16, 16], strides = [1, 1]} : vector<22x16xf32> to vector<16x16xf32>
      %53 = vector.broadcast %51 : f32 to vector<16x16xf32>
      %54 = arith.mulf %53, %52 : vector<16x16xf32>
      %55 = arith.addf %50, %54 : vector<16x16xf32>
      %c70 = arith.constant 70 : index
      %56 = memref.load %arg2[%c70] : memref<99xf32, #tpu.memory_space<smem>>
      %57 = vector.extract_strided_slice %20 {offsets = [3, 0], sizes = [16, 16], strides = [1, 1]} : vector<22x16xf32> to vector<16x16xf32>
      %58 = vector.broadcast %56 : f32 to vector<16x16xf32>
      %59 = arith.mulf %58, %57 : vector<16x16xf32>
      %60 = arith.addf %55, %59 : vector<16x16xf32>
      %c28 = arith.constant 28 : index
      %61 = memref.load %arg2[%c28] : memref<99xf32, #tpu.memory_space<smem>>
      %62 = vector.extract_strided_slice %19 {offsets = [4, 0], sizes = [16, 16], strides = [1, 1]} : vector<22x16xf32> to vector<16x16xf32>
      %63 = vector.broadcast %61 : f32 to vector<16x16xf32>
      %64 = arith.mulf %63, %62 : vector<16x16xf32>
      %65 = arith.addf %60, %64 : vector<16x16xf32>
      %c77 = arith.constant 77 : index
      %66 = memref.load %arg2[%c77] : memref<99xf32, #tpu.memory_space<smem>>
      %67 = vector.extract_strided_slice %20 {offsets = [4, 0], sizes = [16, 16], strides = [1, 1]} : vector<22x16xf32> to vector<16x16xf32>
      %68 = vector.broadcast %66 : f32 to vector<16x16xf32>
      %69 = arith.mulf %68, %67 : vector<16x16xf32>
      %70 = arith.addf %65, %69 : vector<16x16xf32>
      %c35 = arith.constant 35 : index
      %71 = memref.load %arg2[%c35] : memref<99xf32, #tpu.memory_space<smem>>
      %72 = vector.extract_strided_slice %19 {offsets = [5, 0], sizes = [16, 16], strides = [1, 1]} : vector<22x16xf32> to vector<16x16xf32>
      %73 = vector.broadcast %71 : f32 to vector<16x16xf32>
      %74 = arith.mulf %73, %72 : vector<16x16xf32>
      %75 = arith.addf %70, %74 : vector<16x16xf32>
      %c84 = arith.constant 84 : index
      %76 = memref.load %arg2[%c84] : memref<99xf32, #tpu.memory_space<smem>>
      %77 = vector.extract_strided_slice %20 {offsets = [5, 0], sizes = [16, 16], strides = [1, 1]} : vector<22x16xf32> to vector<16x16xf32>
      %78 = vector.broadcast %76 : f32 to vector<16x16xf32>
      %79 = arith.mulf %78, %77 : vector<16x16xf32>
      %80 = arith.addf %75, %79 : vector<16x16xf32>
      %c42 = arith.constant 42 : index
      %81 = memref.load %arg2[%c42] : memref<99xf32, #tpu.memory_space<smem>>
      %82 = vector.extract_strided_slice %19 {offsets = [6, 0], sizes = [16, 16], strides = [1, 1]} : vector<22x16xf32> to vector<16x16xf32>
      %83 = vector.broadcast %81 : f32 to vector<16x16xf32>
      %84 = arith.mulf %83, %82 : vector<16x16xf32>
      %85 = arith.addf %80, %84 : vector<16x16xf32>
      %c91 = arith.constant 91 : index
      %86 = memref.load %arg2[%c91] : memref<99xf32, #tpu.memory_space<smem>>
      %87 = vector.extract_strided_slice %20 {offsets = [6, 0], sizes = [16, 16], strides = [1, 1]} : vector<22x16xf32> to vector<16x16xf32>
      %88 = vector.broadcast %86 : f32 to vector<16x16xf32>
      %89 = arith.mulf %88, %87 : vector<16x16xf32>
      %90 = arith.addf %85, %89 : vector<16x16xf32>
      %91 = vector.extract_strided_slice %14 {offsets = [0, 1], sizes = [22, 16], strides = [1, 1]} : vector<22x22xf32> to vector<22x16xf32>
      %92 = vector.extract_strided_slice %16 {offsets = [0, 1], sizes = [22, 16], strides = [1, 1]} : vector<22x22xf32> to vector<22x16xf32>
      %c1_15 = arith.constant 1 : index
      %93 = memref.load %arg2[%c1_15] : memref<99xf32, #tpu.memory_space<smem>>
      %94 = vector.extract_strided_slice %91 {offsets = [0, 0], sizes = [16, 16], strides = [1, 1]} : vector<22x16xf32> to vector<16x16xf32>
      %95 = vector.broadcast %93 : f32 to vector<16x16xf32>
      %96 = arith.mulf %95, %94 : vector<16x16xf32>
      %97 = arith.addf %90, %96 : vector<16x16xf32>
      %c50 = arith.constant 50 : index
      %98 = memref.load %arg2[%c50] : memref<99xf32, #tpu.memory_space<smem>>
      %99 = vector.extract_strided_slice %92 {offsets = [0, 0], sizes = [16, 16], strides = [1, 1]} : vector<22x16xf32> to vector<16x16xf32>
      %100 = vector.broadcast %98 : f32 to vector<16x16xf32>
      %101 = arith.mulf %100, %99 : vector<16x16xf32>
      %102 = arith.addf %97, %101 : vector<16x16xf32>
      %c8 = arith.constant 8 : index
      %103 = memref.load %arg2[%c8] : memref<99xf32, #tpu.memory_space<smem>>
      %104 = vector.extract_strided_slice %91 {offsets = [1, 0], sizes = [16, 16], strides = [1, 1]} : vector<22x16xf32> to vector<16x16xf32>
      %105 = vector.broadcast %103 : f32 to vector<16x16xf32>
      %106 = arith.mulf %105, %104 : vector<16x16xf32>
      %107 = arith.addf %102, %106 : vector<16x16xf32>
      %c57 = arith.constant 57 : index
      %108 = memref.load %arg2[%c57] : memref<99xf32, #tpu.memory_space<smem>>
      %109 = vector.extract_strided_slice %92 {offsets = [1, 0], sizes = [16, 16], strides = [1, 1]} : vector<22x16xf32> to vector<16x16xf32>
      %110 = vector.broadcast %108 : f32 to vector<16x16xf32>
      %111 = arith.mulf %110, %109 : vector<16x16xf32>
      %112 = arith.addf %107, %111 : vector<16x16xf32>
      %c15 = arith.constant 15 : index
      %113 = memref.load %arg2[%c15] : memref<99xf32, #tpu.memory_space<smem>>
      %114 = vector.extract_strided_slice %91 {offsets = [2, 0], sizes = [16, 16], strides = [1, 1]} : vector<22x16xf32> to vector<16x16xf32>
      %115 = vector.broadcast %113 : f32 to vector<16x16xf32>
      %116 = arith.mulf %115, %114 : vector<16x16xf32>
      %117 = arith.addf %112, %116 : vector<16x16xf32>
      %c64 = arith.constant 64 : index
      %118 = memref.load %arg2[%c64] : memref<99xf32, #tpu.memory_space<smem>>
      %119 = vector.extract_strided_slice %92 {offsets = [2, 0], sizes = [16, 16], strides = [1, 1]} : vector<22x16xf32> to vector<16x16xf32>
      %120 = vector.broadcast %118 : f32 to vector<16x16xf32>
      %121 = arith.mulf %120, %119 : vector<16x16xf32>
      %122 = arith.addf %117, %121 : vector<16x16xf32>
      %c22 = arith.constant 22 : index
      %123 = memref.load %arg2[%c22] : memref<99xf32, #tpu.memory_space<smem>>
      %124 = vector.extract_strided_slice %91 {offsets = [3, 0], sizes = [16, 16], strides = [1, 1]} : vector<22x16xf32> to vector<16x16xf32>
      %125 = vector.broadcast %123 : f32 to vector<16x16xf32>
      %126 = arith.mulf %125, %124 : vector<16x16xf32>
      %127 = arith.addf %122, %126 : vector<16x16xf32>
      %c71 = arith.constant 71 : index
      %128 = memref.load %arg2[%c71] : memref<99xf32, #tpu.memory_space<smem>>
      %129 = vector.extract_strided_slice %92 {offsets = [3, 0], sizes = [16, 16], strides = [1, 1]} : vector<22x16xf32> to vector<16x16xf32>
      %130 = vector.broadcast %128 : f32 to vector<16x16xf32>
      %131 = arith.mulf %130, %129 : vector<16x16xf32>
      %132 = arith.addf %127, %131 : vector<16x16xf32>
      %c29 = arith.constant 29 : index
      %133 = memref.load %arg2[%c29] : memref<99xf32, #tpu.memory_space<smem>>
      %134 = vector.extract_strided_slice %91 {offsets = [4, 0], sizes = [16, 16], strides = [1, 1]} : vector<22x16xf32> to vector<16x16xf32>
      %135 = vector.broadcast %133 : f32 to vector<16x16xf32>
      %136 = arith.mulf %135, %134 : vector<16x16xf32>
      %137 = arith.addf %132, %136 : vector<16x16xf32>
      %c78 = arith.constant 78 : index
      %138 = memref.load %arg2[%c78] : memref<99xf32, #tpu.memory_space<smem>>
      %139 = vector.extract_strided_slice %92 {offsets = [4, 0], sizes = [16, 16], strides = [1, 1]} : vector<22x16xf32> to vector<16x16xf32>
      %140 = vector.broadcast %138 : f32 to vector<16x16xf32>
      %141 = arith.mulf %140, %139 : vector<16x16xf32>
      %142 = arith.addf %137, %141 : vector<16x16xf32>
      %c36 = arith.constant 36 : index
      %143 = memref.load %arg2[%c36] : memref<99xf32, #tpu.memory_space<smem>>
      %144 = vector.extract_strided_slice %91 {offsets = [5, 0], sizes = [16, 16], strides = [1, 1]} : vector<22x16xf32> to vector<16x16xf32>
      %145 = vector.broadcast %143 : f32 to vector<16x16xf32>
      %146 = arith.mulf %145, %144 : vector<16x16xf32>
      %147 = arith.addf %142, %146 : vector<16x16xf32>
      %c85 = arith.constant 85 : index
      %148 = memref.load %arg2[%c85] : memref<99xf32, #tpu.memory_space<smem>>
      %149 = vector.extract_strided_slice %92 {offsets = [5, 0], sizes = [16, 16], strides = [1, 1]} : vector<22x16xf32> to vector<16x16xf32>
      %150 = vector.broadcast %148 : f32 to vector<16x16xf32>
      %151 = arith.mulf %150, %149 : vector<16x16xf32>
      %152 = arith.addf %147, %151 : vector<16x16xf32>
      %c43 = arith.constant 43 : index
      %153 = memref.load %arg2[%c43] : memref<99xf32, #tpu.memory_space<smem>>
      %154 = vector.extract_strided_slice %91 {offsets = [6, 0], sizes = [16, 16], strides = [1, 1]} : vector<22x16xf32> to vector<16x16xf32>
      %155 = vector.broadcast %153 : f32 to vector<16x16xf32>
      %156 = arith.mulf %155, %154 : vector<16x16xf32>
      %157 = arith.addf %152, %156 : vector<16x16xf32>
      %c92 = arith.constant 92 : index
      %158 = memref.load %arg2[%c92] : memref<99xf32, #tpu.memory_space<smem>>
      %159 = vector.extract_strided_slice %92 {offsets = [6, 0], sizes = [16, 16], strides = [1, 1]} : vector<22x16xf32> to vector<16x16xf32>
      %160 = vector.broadcast %158 : f32 to vector<16x16xf32>
      %161 = arith.mulf %160, %159 : vector<16x16xf32>
      %162 = arith.addf %157, %161 : vector<16x16xf32>
      %163 = vector.extract_strided_slice %14 {offsets = [0, 2], sizes = [22, 16], strides = [1, 1]} : vector<22x22xf32> to vector<22x16xf32>
      %164 = vector.extract_strided_slice %16 {offsets = [0, 2], sizes = [22, 16], strides = [1, 1]} : vector<22x22xf32> to vector<22x16xf32>
      %c2 = arith.constant 2 : index
      %165 = memref.load %arg2[%c2] : memref<99xf32, #tpu.memory_space<smem>>
      %166 = vector.extract_strided_slice %163 {offsets = [0, 0], sizes = [16, 16], strides = [1, 1]} : vector<22x16xf32> to vector<16x16xf32>
      %167 = vector.broadcast %165 : f32 to vector<16x16xf32>
      %168 = arith.mulf %167, %166 : vector<16x16xf32>
      %169 = arith.addf %162, %168 : vector<16x16xf32>
      %c51 = arith.constant 51 : index
      %170 = memref.load %arg2[%c51] : memref<99xf32, #tpu.memory_space<smem>>
      %171 = vector.extract_strided_slice %164 {offsets = [0, 0], sizes = [16, 16], strides = [1, 1]} : vector<22x16xf32> to vector<16x16xf32>
      %172 = vector.broadcast %170 : f32 to vector<16x16xf32>
      %173 = arith.mulf %172, %171 : vector<16x16xf32>
      %174 = arith.addf %169, %173 : vector<16x16xf32>
      %c9 = arith.constant 9 : index
      %175 = memref.load %arg2[%c9] : memref<99xf32, #tpu.memory_space<smem>>
      %176 = vector.extract_strided_slice %163 {offsets = [1, 0], sizes = [16, 16], strides = [1, 1]} : vector<22x16xf32> to vector<16x16xf32>
      %177 = vector.broadcast %175 : f32 to vector<16x16xf32>
      %178 = arith.mulf %177, %176 : vector<16x16xf32>
      %179 = arith.addf %174, %178 : vector<16x16xf32>
      %c58 = arith.constant 58 : index
      %180 = memref.load %arg2[%c58] : memref<99xf32, #tpu.memory_space<smem>>
      %181 = vector.extract_strided_slice %164 {offsets = [1, 0], sizes = [16, 16], strides = [1, 1]} : vector<22x16xf32> to vector<16x16xf32>
      %182 = vector.broadcast %180 : f32 to vector<16x16xf32>
      %183 = arith.mulf %182, %181 : vector<16x16xf32>
      %184 = arith.addf %179, %183 : vector<16x16xf32>
      %c16 = arith.constant 16 : index
      %185 = memref.load %arg2[%c16] : memref<99xf32, #tpu.memory_space<smem>>
      %186 = vector.extract_strided_slice %163 {offsets = [2, 0], sizes = [16, 16], strides = [1, 1]} : vector<22x16xf32> to vector<16x16xf32>
      %187 = vector.broadcast %185 : f32 to vector<16x16xf32>
      %188 = arith.mulf %187, %186 : vector<16x16xf32>
      %189 = arith.addf %184, %188 : vector<16x16xf32>
      %c65 = arith.constant 65 : index
      %190 = memref.load %arg2[%c65] : memref<99xf32, #tpu.memory_space<smem>>
      %191 = vector.extract_strided_slice %164 {offsets = [2, 0], sizes = [16, 16], strides = [1, 1]} : vector<22x16xf32> to vector<16x16xf32>
      %192 = vector.broadcast %190 : f32 to vector<16x16xf32>
      %193 = arith.mulf %192, %191 : vector<16x16xf32>
      %194 = arith.addf %189, %193 : vector<16x16xf32>
      %c23 = arith.constant 23 : index
      %195 = memref.load %arg2[%c23] : memref<99xf32, #tpu.memory_space<smem>>
      %196 = vector.extract_strided_slice %163 {offsets = [3, 0], sizes = [16, 16], strides = [1, 1]} : vector<22x16xf32> to vector<16x16xf32>
      %197 = vector.broadcast %195 : f32 to vector<16x16xf32>
      %198 = arith.mulf %197, %196 : vector<16x16xf32>
      %199 = arith.addf %194, %198 : vector<16x16xf32>
      %c72 = arith.constant 72 : index
      %200 = memref.load %arg2[%c72] : memref<99xf32, #tpu.memory_space<smem>>
      %201 = vector.extract_strided_slice %164 {offsets = [3, 0], sizes = [16, 16], strides = [1, 1]} : vector<22x16xf32> to vector<16x16xf32>
      %202 = vector.broadcast %200 : f32 to vector<16x16xf32>
      %203 = arith.mulf %202, %201 : vector<16x16xf32>
      %204 = arith.addf %199, %203 : vector<16x16xf32>
      %c30 = arith.constant 30 : index
      %205 = memref.load %arg2[%c30] : memref<99xf32, #tpu.memory_space<smem>>
      %206 = vector.extract_strided_slice %163 {offsets = [4, 0], sizes = [16, 16], strides = [1, 1]} : vector<22x16xf32> to vector<16x16xf32>
      %207 = vector.broadcast %205 : f32 to vector<16x16xf32>
      %208 = arith.mulf %207, %206 : vector<16x16xf32>
      %209 = arith.addf %204, %208 : vector<16x16xf32>
      %c79 = arith.constant 79 : index
      %210 = memref.load %arg2[%c79] : memref<99xf32, #tpu.memory_space<smem>>
      %211 = vector.extract_strided_slice %164 {offsets = [4, 0], sizes = [16, 16], strides = [1, 1]} : vector<22x16xf32> to vector<16x16xf32>
      %212 = vector.broadcast %210 : f32 to vector<16x16xf32>
      %213 = arith.mulf %212, %211 : vector<16x16xf32>
      %214 = arith.addf %209, %213 : vector<16x16xf32>
      %c37 = arith.constant 37 : index
      %215 = memref.load %arg2[%c37] : memref<99xf32, #tpu.memory_space<smem>>
      %216 = vector.extract_strided_slice %163 {offsets = [5, 0], sizes = [16, 16], strides = [1, 1]} : vector<22x16xf32> to vector<16x16xf32>
      %217 = vector.broadcast %215 : f32 to vector<16x16xf32>
      %218 = arith.mulf %217, %216 : vector<16x16xf32>
      %219 = arith.addf %214, %218 : vector<16x16xf32>
      %c86 = arith.constant 86 : index
      %220 = memref.load %arg2[%c86] : memref<99xf32, #tpu.memory_space<smem>>
      %221 = vector.extract_strided_slice %164 {offsets = [5, 0], sizes = [16, 16], strides = [1, 1]} : vector<22x16xf32> to vector<16x16xf32>
      %222 = vector.broadcast %220 : f32 to vector<16x16xf32>
      %223 = arith.mulf %222, %221 : vector<16x16xf32>
      %224 = arith.addf %219, %223 : vector<16x16xf32>
      %c44 = arith.constant 44 : index
      %225 = memref.load %arg2[%c44] : memref<99xf32, #tpu.memory_space<smem>>
      %226 = vector.extract_strided_slice %163 {offsets = [6, 0], sizes = [16, 16], strides = [1, 1]} : vector<22x16xf32> to vector<16x16xf32>
      %227 = vector.broadcast %225 : f32 to vector<16x16xf32>
      %228 = arith.mulf %227, %226 : vector<16x16xf32>
      %229 = arith.addf %224, %228 : vector<16x16xf32>
      %c93 = arith.constant 93 : index
      %230 = memref.load %arg2[%c93] : memref<99xf32, #tpu.memory_space<smem>>
      %231 = vector.extract_strided_slice %164 {offsets = [6, 0], sizes = [16, 16], strides = [1, 1]} : vector<22x16xf32> to vector<16x16xf32>
      %232 = vector.broadcast %230 : f32 to vector<16x16xf32>
      %233 = arith.mulf %232, %231 : vector<16x16xf32>
      %234 = arith.addf %229, %233 : vector<16x16xf32>
      %235 = vector.extract_strided_slice %14 {offsets = [0, 3], sizes = [22, 16], strides = [1, 1]} : vector<22x22xf32> to vector<22x16xf32>
      %236 = vector.extract_strided_slice %16 {offsets = [0, 3], sizes = [22, 16], strides = [1, 1]} : vector<22x22xf32> to vector<22x16xf32>
      %c3 = arith.constant 3 : index
      %237 = memref.load %arg2[%c3] : memref<99xf32, #tpu.memory_space<smem>>
      %238 = vector.extract_strided_slice %235 {offsets = [0, 0], sizes = [16, 16], strides = [1, 1]} : vector<22x16xf32> to vector<16x16xf32>
      %239 = vector.broadcast %237 : f32 to vector<16x16xf32>
      %240 = arith.mulf %239, %238 : vector<16x16xf32>
      %241 = arith.addf %234, %240 : vector<16x16xf32>
      %c52 = arith.constant 52 : index
      %242 = memref.load %arg2[%c52] : memref<99xf32, #tpu.memory_space<smem>>
      %243 = vector.extract_strided_slice %236 {offsets = [0, 0], sizes = [16, 16], strides = [1, 1]} : vector<22x16xf32> to vector<16x16xf32>
      %244 = vector.broadcast %242 : f32 to vector<16x16xf32>
      %245 = arith.mulf %244, %243 : vector<16x16xf32>
      %246 = arith.addf %241, %245 : vector<16x16xf32>
      %c10 = arith.constant 10 : index
      %247 = memref.load %arg2[%c10] : memref<99xf32, #tpu.memory_space<smem>>
      %248 = vector.extract_strided_slice %235 {offsets = [1, 0], sizes = [16, 16], strides = [1, 1]} : vector<22x16xf32> to vector<16x16xf32>
      %249 = vector.broadcast %247 : f32 to vector<16x16xf32>
      %250 = arith.mulf %249, %248 : vector<16x16xf32>
      %251 = arith.addf %246, %250 : vector<16x16xf32>
      %c59 = arith.constant 59 : index
      %252 = memref.load %arg2[%c59] : memref<99xf32, #tpu.memory_space<smem>>
      %253 = vector.extract_strided_slice %236 {offsets = [1, 0], sizes = [16, 16], strides = [1, 1]} : vector<22x16xf32> to vector<16x16xf32>
      %254 = vector.broadcast %252 : f32 to vector<16x16xf32>
      %255 = arith.mulf %254, %253 : vector<16x16xf32>
      %256 = arith.addf %251, %255 : vector<16x16xf32>
      %c17 = arith.constant 17 : index
      %257 = memref.load %arg2[%c17] : memref<99xf32, #tpu.memory_space<smem>>
      %258 = vector.extract_strided_slice %235 {offsets = [2, 0], sizes = [16, 16], strides = [1, 1]} : vector<22x16xf32> to vector<16x16xf32>
      %259 = vector.broadcast %257 : f32 to vector<16x16xf32>
      %260 = arith.mulf %259, %258 : vector<16x16xf32>
      %261 = arith.addf %256, %260 : vector<16x16xf32>
      %c66 = arith.constant 66 : index
      %262 = memref.load %arg2[%c66] : memref<99xf32, #tpu.memory_space<smem>>
      %263 = vector.extract_strided_slice %236 {offsets = [2, 0], sizes = [16, 16], strides = [1, 1]} : vector<22x16xf32> to vector<16x16xf32>
      %264 = vector.broadcast %262 : f32 to vector<16x16xf32>
      %265 = arith.mulf %264, %263 : vector<16x16xf32>
      %266 = arith.addf %261, %265 : vector<16x16xf32>
      %c24 = arith.constant 24 : index
      %267 = memref.load %arg2[%c24] : memref<99xf32, #tpu.memory_space<smem>>
      %268 = vector.extract_strided_slice %235 {offsets = [3, 0], sizes = [16, 16], strides = [1, 1]} : vector<22x16xf32> to vector<16x16xf32>
      %269 = vector.broadcast %267 : f32 to vector<16x16xf32>
      %270 = arith.mulf %269, %268 : vector<16x16xf32>
      %271 = arith.addf %266, %270 : vector<16x16xf32>
      %c73 = arith.constant 73 : index
      %272 = memref.load %arg2[%c73] : memref<99xf32, #tpu.memory_space<smem>>
      %273 = vector.extract_strided_slice %236 {offsets = [3, 0], sizes = [16, 16], strides = [1, 1]} : vector<22x16xf32> to vector<16x16xf32>
      %274 = vector.broadcast %272 : f32 to vector<16x16xf32>
      %275 = arith.mulf %274, %273 : vector<16x16xf32>
      %276 = arith.addf %271, %275 : vector<16x16xf32>
      %c31 = arith.constant 31 : index
      %277 = memref.load %arg2[%c31] : memref<99xf32, #tpu.memory_space<smem>>
      %278 = vector.extract_strided_slice %235 {offsets = [4, 0], sizes = [16, 16], strides = [1, 1]} : vector<22x16xf32> to vector<16x16xf32>
      %279 = vector.broadcast %277 : f32 to vector<16x16xf32>
      %280 = arith.mulf %279, %278 : vector<16x16xf32>
      %281 = arith.addf %276, %280 : vector<16x16xf32>
      %c80 = arith.constant 80 : index
      %282 = memref.load %arg2[%c80] : memref<99xf32, #tpu.memory_space<smem>>
      %283 = vector.extract_strided_slice %236 {offsets = [4, 0], sizes = [16, 16], strides = [1, 1]} : vector<22x16xf32> to vector<16x16xf32>
      %284 = vector.broadcast %282 : f32 to vector<16x16xf32>
      %285 = arith.mulf %284, %283 : vector<16x16xf32>
      %286 = arith.addf %281, %285 : vector<16x16xf32>
      %c38 = arith.constant 38 : index
      %287 = memref.load %arg2[%c38] : memref<99xf32, #tpu.memory_space<smem>>
      %288 = vector.extract_strided_slice %235 {offsets = [5, 0], sizes = [16, 16], strides = [1, 1]} : vector<22x16xf32> to vector<16x16xf32>
      %289 = vector.broadcast %287 : f32 to vector<16x16xf32>
      %290 = arith.mulf %289, %288 : vector<16x16xf32>
      %291 = arith.addf %286, %290 : vector<16x16xf32>
      %c87 = arith.constant 87 : index
      %292 = memref.load %arg2[%c87] : memref<99xf32, #tpu.memory_space<smem>>
      %293 = vector.extract_strided_slice %236 {offsets = [5, 0], sizes = [16, 16], strides = [1, 1]} : vector<22x16xf32> to vector<16x16xf32>
      %294 = vector.broadcast %292 : f32 to vector<16x16xf32>
      %295 = arith.mulf %294, %293 : vector<16x16xf32>
      %296 = arith.addf %291, %295 : vector<16x16xf32>
      %c45 = arith.constant 45 : index
      %297 = memref.load %arg2[%c45] : memref<99xf32, #tpu.memory_space<smem>>
      %298 = vector.extract_strided_slice %235 {offsets = [6, 0], sizes = [16, 16], strides = [1, 1]} : vector<22x16xf32> to vector<16x16xf32>
      %299 = vector.broadcast %297 : f32 to vector<16x16xf32>
      %300 = arith.mulf %299, %298 : vector<16x16xf32>
      %301 = arith.addf %296, %300 : vector<16x16xf32>
      %c94 = arith.constant 94 : index
      %302 = memref.load %arg2[%c94] : memref<99xf32, #tpu.memory_space<smem>>
      %303 = vector.extract_strided_slice %236 {offsets = [6, 0], sizes = [16, 16], strides = [1, 1]} : vector<22x16xf32> to vector<16x16xf32>
      %304 = vector.broadcast %302 : f32 to vector<16x16xf32>
      %305 = arith.mulf %304, %303 : vector<16x16xf32>
      %306 = arith.addf %301, %305 : vector<16x16xf32>
      %307 = vector.extract_strided_slice %14 {offsets = [0, 4], sizes = [22, 16], strides = [1, 1]} : vector<22x22xf32> to vector<22x16xf32>
      %308 = vector.extract_strided_slice %16 {offsets = [0, 4], sizes = [22, 16], strides = [1, 1]} : vector<22x22xf32> to vector<22x16xf32>
      %c4 = arith.constant 4 : index
      %309 = memref.load %arg2[%c4] : memref<99xf32, #tpu.memory_space<smem>>
      %310 = vector.extract_strided_slice %307 {offsets = [0, 0], sizes = [16, 16], strides = [1, 1]} : vector<22x16xf32> to vector<16x16xf32>
      %311 = vector.broadcast %309 : f32 to vector<16x16xf32>
      %312 = arith.mulf %311, %310 : vector<16x16xf32>
      %313 = arith.addf %306, %312 : vector<16x16xf32>
      %c53 = arith.constant 53 : index
      %314 = memref.load %arg2[%c53] : memref<99xf32, #tpu.memory_space<smem>>
      %315 = vector.extract_strided_slice %308 {offsets = [0, 0], sizes = [16, 16], strides = [1, 1]} : vector<22x16xf32> to vector<16x16xf32>
      %316 = vector.broadcast %314 : f32 to vector<16x16xf32>
      %317 = arith.mulf %316, %315 : vector<16x16xf32>
      %318 = arith.addf %313, %317 : vector<16x16xf32>
      %c11 = arith.constant 11 : index
      %319 = memref.load %arg2[%c11] : memref<99xf32, #tpu.memory_space<smem>>
      %320 = vector.extract_strided_slice %307 {offsets = [1, 0], sizes = [16, 16], strides = [1, 1]} : vector<22x16xf32> to vector<16x16xf32>
      %321 = vector.broadcast %319 : f32 to vector<16x16xf32>
      %322 = arith.mulf %321, %320 : vector<16x16xf32>
      %323 = arith.addf %318, %322 : vector<16x16xf32>
      %c60 = arith.constant 60 : index
      %324 = memref.load %arg2[%c60] : memref<99xf32, #tpu.memory_space<smem>>
      %325 = vector.extract_strided_slice %308 {offsets = [1, 0], sizes = [16, 16], strides = [1, 1]} : vector<22x16xf32> to vector<16x16xf32>
      %326 = vector.broadcast %324 : f32 to vector<16x16xf32>
      %327 = arith.mulf %326, %325 : vector<16x16xf32>
      %328 = arith.addf %323, %327 : vector<16x16xf32>
      %c18 = arith.constant 18 : index
      %329 = memref.load %arg2[%c18] : memref<99xf32, #tpu.memory_space<smem>>
      %330 = vector.extract_strided_slice %307 {offsets = [2, 0], sizes = [16, 16], strides = [1, 1]} : vector<22x16xf32> to vector<16x16xf32>
      %331 = vector.broadcast %329 : f32 to vector<16x16xf32>
      %332 = arith.mulf %331, %330 : vector<16x16xf32>
      %333 = arith.addf %328, %332 : vector<16x16xf32>
      %c67 = arith.constant 67 : index
      %334 = memref.load %arg2[%c67] : memref<99xf32, #tpu.memory_space<smem>>
      %335 = vector.extract_strided_slice %308 {offsets = [2, 0], sizes = [16, 16], strides = [1, 1]} : vector<22x16xf32> to vector<16x16xf32>
      %336 = vector.broadcast %334 : f32 to vector<16x16xf32>
      %337 = arith.mulf %336, %335 : vector<16x16xf32>
      %338 = arith.addf %333, %337 : vector<16x16xf32>
      %c25 = arith.constant 25 : index
      %339 = memref.load %arg2[%c25] : memref<99xf32, #tpu.memory_space<smem>>
      %340 = vector.extract_strided_slice %307 {offsets = [3, 0], sizes = [16, 16], strides = [1, 1]} : vector<22x16xf32> to vector<16x16xf32>
      %341 = vector.broadcast %339 : f32 to vector<16x16xf32>
      %342 = arith.mulf %341, %340 : vector<16x16xf32>
      %343 = arith.addf %338, %342 : vector<16x16xf32>
      %c74 = arith.constant 74 : index
      %344 = memref.load %arg2[%c74] : memref<99xf32, #tpu.memory_space<smem>>
      %345 = vector.extract_strided_slice %308 {offsets = [3, 0], sizes = [16, 16], strides = [1, 1]} : vector<22x16xf32> to vector<16x16xf32>
      %346 = vector.broadcast %344 : f32 to vector<16x16xf32>
      %347 = arith.mulf %346, %345 : vector<16x16xf32>
      %348 = arith.addf %343, %347 : vector<16x16xf32>
      %c32 = arith.constant 32 : index
      %349 = memref.load %arg2[%c32] : memref<99xf32, #tpu.memory_space<smem>>
      %350 = vector.extract_strided_slice %307 {offsets = [4, 0], sizes = [16, 16], strides = [1, 1]} : vector<22x16xf32> to vector<16x16xf32>
      %351 = vector.broadcast %349 : f32 to vector<16x16xf32>
      %352 = arith.mulf %351, %350 : vector<16x16xf32>
      %353 = arith.addf %348, %352 : vector<16x16xf32>
      %c81 = arith.constant 81 : index
      %354 = memref.load %arg2[%c81] : memref<99xf32, #tpu.memory_space<smem>>
      %355 = vector.extract_strided_slice %308 {offsets = [4, 0], sizes = [16, 16], strides = [1, 1]} : vector<22x16xf32> to vector<16x16xf32>
      %356 = vector.broadcast %354 : f32 to vector<16x16xf32>
      %357 = arith.mulf %356, %355 : vector<16x16xf32>
      %358 = arith.addf %353, %357 : vector<16x16xf32>
      %c39 = arith.constant 39 : index
      %359 = memref.load %arg2[%c39] : memref<99xf32, #tpu.memory_space<smem>>
      %360 = vector.extract_strided_slice %307 {offsets = [5, 0], sizes = [16, 16], strides = [1, 1]} : vector<22x16xf32> to vector<16x16xf32>
      %361 = vector.broadcast %359 : f32 to vector<16x16xf32>
      %362 = arith.mulf %361, %360 : vector<16x16xf32>
      %363 = arith.addf %358, %362 : vector<16x16xf32>
      %c88 = arith.constant 88 : index
      %364 = memref.load %arg2[%c88] : memref<99xf32, #tpu.memory_space<smem>>
      %365 = vector.extract_strided_slice %308 {offsets = [5, 0], sizes = [16, 16], strides = [1, 1]} : vector<22x16xf32> to vector<16x16xf32>
      %366 = vector.broadcast %364 : f32 to vector<16x16xf32>
      %367 = arith.mulf %366, %365 : vector<16x16xf32>
      %368 = arith.addf %363, %367 : vector<16x16xf32>
      %c46 = arith.constant 46 : index
      %369 = memref.load %arg2[%c46] : memref<99xf32, #tpu.memory_space<smem>>
      %370 = vector.extract_strided_slice %307 {offsets = [6, 0], sizes = [16, 16], strides = [1, 1]} : vector<22x16xf32> to vector<16x16xf32>
      %371 = vector.broadcast %369 : f32 to vector<16x16xf32>
      %372 = arith.mulf %371, %370 : vector<16x16xf32>
      %373 = arith.addf %368, %372 : vector<16x16xf32>
      %c95 = arith.constant 95 : index
      %374 = memref.load %arg2[%c95] : memref<99xf32, #tpu.memory_space<smem>>
      %375 = vector.extract_strided_slice %308 {offsets = [6, 0], sizes = [16, 16], strides = [1, 1]} : vector<22x16xf32> to vector<16x16xf32>
      %376 = vector.broadcast %374 : f32 to vector<16x16xf32>
      %377 = arith.mulf %376, %375 : vector<16x16xf32>
      %378 = arith.addf %373, %377 : vector<16x16xf32>
      %379 = vector.extract_strided_slice %14 {offsets = [0, 5], sizes = [22, 16], strides = [1, 1]} : vector<22x22xf32> to vector<22x16xf32>
      %380 = vector.extract_strided_slice %16 {offsets = [0, 5], sizes = [22, 16], strides = [1, 1]} : vector<22x22xf32> to vector<22x16xf32>
      %c5 = arith.constant 5 : index
      %381 = memref.load %arg2[%c5] : memref<99xf32, #tpu.memory_space<smem>>
      %382 = vector.extract_strided_slice %379 {offsets = [0, 0], sizes = [16, 16], strides = [1, 1]} : vector<22x16xf32> to vector<16x16xf32>
      %383 = vector.broadcast %381 : f32 to vector<16x16xf32>
      %384 = arith.mulf %383, %382 : vector<16x16xf32>
      %385 = arith.addf %378, %384 : vector<16x16xf32>
      %c54 = arith.constant 54 : index
      %386 = memref.load %arg2[%c54] : memref<99xf32, #tpu.memory_space<smem>>
      %387 = vector.extract_strided_slice %380 {offsets = [0, 0], sizes = [16, 16], strides = [1, 1]} : vector<22x16xf32> to vector<16x16xf32>
      %388 = vector.broadcast %386 : f32 to vector<16x16xf32>
      %389 = arith.mulf %388, %387 : vector<16x16xf32>
      %390 = arith.addf %385, %389 : vector<16x16xf32>
      %c12 = arith.constant 12 : index
      %391 = memref.load %arg2[%c12] : memref<99xf32, #tpu.memory_space<smem>>
      %392 = vector.extract_strided_slice %379 {offsets = [1, 0], sizes = [16, 16], strides = [1, 1]} : vector<22x16xf32> to vector<16x16xf32>
      %393 = vector.broadcast %391 : f32 to vector<16x16xf32>
      %394 = arith.mulf %393, %392 : vector<16x16xf32>
      %395 = arith.addf %390, %394 : vector<16x16xf32>
      %c61 = arith.constant 61 : index
      %396 = memref.load %arg2[%c61] : memref<99xf32, #tpu.memory_space<smem>>
      %397 = vector.extract_strided_slice %380 {offsets = [1, 0], sizes = [16, 16], strides = [1, 1]} : vector<22x16xf32> to vector<16x16xf32>
      %398 = vector.broadcast %396 : f32 to vector<16x16xf32>
      %399 = arith.mulf %398, %397 : vector<16x16xf32>
      %400 = arith.addf %395, %399 : vector<16x16xf32>
      %c19 = arith.constant 19 : index
      %401 = memref.load %arg2[%c19] : memref<99xf32, #tpu.memory_space<smem>>
      %402 = vector.extract_strided_slice %379 {offsets = [2, 0], sizes = [16, 16], strides = [1, 1]} : vector<22x16xf32> to vector<16x16xf32>
      %403 = vector.broadcast %401 : f32 to vector<16x16xf32>
      %404 = arith.mulf %403, %402 : vector<16x16xf32>
      %405 = arith.addf %400, %404 : vector<16x16xf32>
      %c68 = arith.constant 68 : index
      %406 = memref.load %arg2[%c68] : memref<99xf32, #tpu.memory_space<smem>>
      %407 = vector.extract_strided_slice %380 {offsets = [2, 0], sizes = [16, 16], strides = [1, 1]} : vector<22x16xf32> to vector<16x16xf32>
      %408 = vector.broadcast %406 : f32 to vector<16x16xf32>
      %409 = arith.mulf %408, %407 : vector<16x16xf32>
      %410 = arith.addf %405, %409 : vector<16x16xf32>
      %c26 = arith.constant 26 : index
      %411 = memref.load %arg2[%c26] : memref<99xf32, #tpu.memory_space<smem>>
      %412 = vector.extract_strided_slice %379 {offsets = [3, 0], sizes = [16, 16], strides = [1, 1]} : vector<22x16xf32> to vector<16x16xf32>
      %413 = vector.broadcast %411 : f32 to vector<16x16xf32>
      %414 = arith.mulf %413, %412 : vector<16x16xf32>
      %415 = arith.addf %410, %414 : vector<16x16xf32>
      %c75 = arith.constant 75 : index
      %416 = memref.load %arg2[%c75] : memref<99xf32, #tpu.memory_space<smem>>
      %417 = vector.extract_strided_slice %380 {offsets = [3, 0], sizes = [16, 16], strides = [1, 1]} : vector<22x16xf32> to vector<16x16xf32>
      %418 = vector.broadcast %416 : f32 to vector<16x16xf32>
      %419 = arith.mulf %418, %417 : vector<16x16xf32>
      %420 = arith.addf %415, %419 : vector<16x16xf32>
      %c33 = arith.constant 33 : index
      %421 = memref.load %arg2[%c33] : memref<99xf32, #tpu.memory_space<smem>>
      %422 = vector.extract_strided_slice %379 {offsets = [4, 0], sizes = [16, 16], strides = [1, 1]} : vector<22x16xf32> to vector<16x16xf32>
      %423 = vector.broadcast %421 : f32 to vector<16x16xf32>
      %424 = arith.mulf %423, %422 : vector<16x16xf32>
      %425 = arith.addf %420, %424 : vector<16x16xf32>
      %c82 = arith.constant 82 : index
      %426 = memref.load %arg2[%c82] : memref<99xf32, #tpu.memory_space<smem>>
      %427 = vector.extract_strided_slice %380 {offsets = [4, 0], sizes = [16, 16], strides = [1, 1]} : vector<22x16xf32> to vector<16x16xf32>
      %428 = vector.broadcast %426 : f32 to vector<16x16xf32>
      %429 = arith.mulf %428, %427 : vector<16x16xf32>
      %430 = arith.addf %425, %429 : vector<16x16xf32>
      %c40 = arith.constant 40 : index
      %431 = memref.load %arg2[%c40] : memref<99xf32, #tpu.memory_space<smem>>
      %432 = vector.extract_strided_slice %379 {offsets = [5, 0], sizes = [16, 16], strides = [1, 1]} : vector<22x16xf32> to vector<16x16xf32>
      %433 = vector.broadcast %431 : f32 to vector<16x16xf32>
      %434 = arith.mulf %433, %432 : vector<16x16xf32>
      %435 = arith.addf %430, %434 : vector<16x16xf32>
      %c89 = arith.constant 89 : index
      %436 = memref.load %arg2[%c89] : memref<99xf32, #tpu.memory_space<smem>>
      %437 = vector.extract_strided_slice %380 {offsets = [5, 0], sizes = [16, 16], strides = [1, 1]} : vector<22x16xf32> to vector<16x16xf32>
      %438 = vector.broadcast %436 : f32 to vector<16x16xf32>
      %439 = arith.mulf %438, %437 : vector<16x16xf32>
      %440 = arith.addf %435, %439 : vector<16x16xf32>
      %c47 = arith.constant 47 : index
      %441 = memref.load %arg2[%c47] : memref<99xf32, #tpu.memory_space<smem>>
      %442 = vector.extract_strided_slice %379 {offsets = [6, 0], sizes = [16, 16], strides = [1, 1]} : vector<22x16xf32> to vector<16x16xf32>
      %443 = vector.broadcast %441 : f32 to vector<16x16xf32>
      %444 = arith.mulf %443, %442 : vector<16x16xf32>
      %445 = arith.addf %440, %444 : vector<16x16xf32>
      %c96 = arith.constant 96 : index
      %446 = memref.load %arg2[%c96] : memref<99xf32, #tpu.memory_space<smem>>
      %447 = vector.extract_strided_slice %380 {offsets = [6, 0], sizes = [16, 16], strides = [1, 1]} : vector<22x16xf32> to vector<16x16xf32>
      %448 = vector.broadcast %446 : f32 to vector<16x16xf32>
      %449 = arith.mulf %448, %447 : vector<16x16xf32>
      %450 = arith.addf %445, %449 : vector<16x16xf32>
      %451 = vector.extract_strided_slice %14 {offsets = [0, 6], sizes = [22, 16], strides = [1, 1]} : vector<22x22xf32> to vector<22x16xf32>
      %452 = vector.extract_strided_slice %16 {offsets = [0, 6], sizes = [22, 16], strides = [1, 1]} : vector<22x22xf32> to vector<22x16xf32>
      %c6 = arith.constant 6 : index
      %453 = memref.load %arg2[%c6] : memref<99xf32, #tpu.memory_space<smem>>
      %454 = vector.extract_strided_slice %451 {offsets = [0, 0], sizes = [16, 16], strides = [1, 1]} : vector<22x16xf32> to vector<16x16xf32>
      %455 = vector.broadcast %453 : f32 to vector<16x16xf32>
      %456 = arith.mulf %455, %454 : vector<16x16xf32>
      %457 = arith.addf %450, %456 : vector<16x16xf32>
      %c55 = arith.constant 55 : index
      %458 = memref.load %arg2[%c55] : memref<99xf32, #tpu.memory_space<smem>>
      %459 = vector.extract_strided_slice %452 {offsets = [0, 0], sizes = [16, 16], strides = [1, 1]} : vector<22x16xf32> to vector<16x16xf32>
      %460 = vector.broadcast %458 : f32 to vector<16x16xf32>
      %461 = arith.mulf %460, %459 : vector<16x16xf32>
      %462 = arith.addf %457, %461 : vector<16x16xf32>
      %c13 = arith.constant 13 : index
      %463 = memref.load %arg2[%c13] : memref<99xf32, #tpu.memory_space<smem>>
      %464 = vector.extract_strided_slice %451 {offsets = [1, 0], sizes = [16, 16], strides = [1, 1]} : vector<22x16xf32> to vector<16x16xf32>
      %465 = vector.broadcast %463 : f32 to vector<16x16xf32>
      %466 = arith.mulf %465, %464 : vector<16x16xf32>
      %467 = arith.addf %462, %466 : vector<16x16xf32>
      %c62 = arith.constant 62 : index
      %468 = memref.load %arg2[%c62] : memref<99xf32, #tpu.memory_space<smem>>
      %469 = vector.extract_strided_slice %452 {offsets = [1, 0], sizes = [16, 16], strides = [1, 1]} : vector<22x16xf32> to vector<16x16xf32>
      %470 = vector.broadcast %468 : f32 to vector<16x16xf32>
      %471 = arith.mulf %470, %469 : vector<16x16xf32>
      %472 = arith.addf %467, %471 : vector<16x16xf32>
      %c20 = arith.constant 20 : index
      %473 = memref.load %arg2[%c20] : memref<99xf32, #tpu.memory_space<smem>>
      %474 = vector.extract_strided_slice %451 {offsets = [2, 0], sizes = [16, 16], strides = [1, 1]} : vector<22x16xf32> to vector<16x16xf32>
      %475 = vector.broadcast %473 : f32 to vector<16x16xf32>
      %476 = arith.mulf %475, %474 : vector<16x16xf32>
      %477 = arith.addf %472, %476 : vector<16x16xf32>
      %c69 = arith.constant 69 : index
      %478 = memref.load %arg2[%c69] : memref<99xf32, #tpu.memory_space<smem>>
      %479 = vector.extract_strided_slice %452 {offsets = [2, 0], sizes = [16, 16], strides = [1, 1]} : vector<22x16xf32> to vector<16x16xf32>
      %480 = vector.broadcast %478 : f32 to vector<16x16xf32>
      %481 = arith.mulf %480, %479 : vector<16x16xf32>
      %482 = arith.addf %477, %481 : vector<16x16xf32>
      %c27 = arith.constant 27 : index
      %483 = memref.load %arg2[%c27] : memref<99xf32, #tpu.memory_space<smem>>
      %484 = vector.extract_strided_slice %451 {offsets = [3, 0], sizes = [16, 16], strides = [1, 1]} : vector<22x16xf32> to vector<16x16xf32>
      %485 = vector.broadcast %483 : f32 to vector<16x16xf32>
      %486 = arith.mulf %485, %484 : vector<16x16xf32>
      %487 = arith.addf %482, %486 : vector<16x16xf32>
      %c76 = arith.constant 76 : index
      %488 = memref.load %arg2[%c76] : memref<99xf32, #tpu.memory_space<smem>>
      %489 = vector.extract_strided_slice %452 {offsets = [3, 0], sizes = [16, 16], strides = [1, 1]} : vector<22x16xf32> to vector<16x16xf32>
      %490 = vector.broadcast %488 : f32 to vector<16x16xf32>
      %491 = arith.mulf %490, %489 : vector<16x16xf32>
      %492 = arith.addf %487, %491 : vector<16x16xf32>
      %c34 = arith.constant 34 : index
      %493 = memref.load %arg2[%c34] : memref<99xf32, #tpu.memory_space<smem>>
      %494 = vector.extract_strided_slice %451 {offsets = [4, 0], sizes = [16, 16], strides = [1, 1]} : vector<22x16xf32> to vector<16x16xf32>
      %495 = vector.broadcast %493 : f32 to vector<16x16xf32>
      %496 = arith.mulf %495, %494 : vector<16x16xf32>
      %497 = arith.addf %492, %496 : vector<16x16xf32>
      %c83 = arith.constant 83 : index
      %498 = memref.load %arg2[%c83] : memref<99xf32, #tpu.memory_space<smem>>
      %499 = vector.extract_strided_slice %452 {offsets = [4, 0], sizes = [16, 16], strides = [1, 1]} : vector<22x16xf32> to vector<16x16xf32>
      %500 = vector.broadcast %498 : f32 to vector<16x16xf32>
      %501 = arith.mulf %500, %499 : vector<16x16xf32>
      %502 = arith.addf %497, %501 : vector<16x16xf32>
      %c41 = arith.constant 41 : index
      %503 = memref.load %arg2[%c41] : memref<99xf32, #tpu.memory_space<smem>>
      %504 = vector.extract_strided_slice %451 {offsets = [5, 0], sizes = [16, 16], strides = [1, 1]} : vector<22x16xf32> to vector<16x16xf32>
      %505 = vector.broadcast %503 : f32 to vector<16x16xf32>
      %506 = arith.mulf %505, %504 : vector<16x16xf32>
      %507 = arith.addf %502, %506 : vector<16x16xf32>
      %c90 = arith.constant 90 : index
      %508 = memref.load %arg2[%c90] : memref<99xf32, #tpu.memory_space<smem>>
      %509 = vector.extract_strided_slice %452 {offsets = [5, 0], sizes = [16, 16], strides = [1, 1]} : vector<22x16xf32> to vector<16x16xf32>
      %510 = vector.broadcast %508 : f32 to vector<16x16xf32>
      %511 = arith.mulf %510, %509 : vector<16x16xf32>
      %512 = arith.addf %507, %511 : vector<16x16xf32>
      %c48 = arith.constant 48 : index
      %513 = memref.load %arg2[%c48] : memref<99xf32, #tpu.memory_space<smem>>
      %514 = vector.extract_strided_slice %451 {offsets = [6, 0], sizes = [16, 16], strides = [1, 1]} : vector<22x16xf32> to vector<16x16xf32>
      %515 = vector.broadcast %513 : f32 to vector<16x16xf32>
      %516 = arith.mulf %515, %514 : vector<16x16xf32>
      %517 = arith.addf %512, %516 : vector<16x16xf32>
      %c97 = arith.constant 97 : index
      %518 = memref.load %arg2[%c97] : memref<99xf32, #tpu.memory_space<smem>>
      %519 = vector.extract_strided_slice %452 {offsets = [6, 0], sizes = [16, 16], strides = [1, 1]} : vector<22x16xf32> to vector<16x16xf32>
      %520 = vector.broadcast %518 : f32 to vector<16x16xf32>
      %521 = arith.mulf %520, %519 : vector<16x16xf32>
      %522 = arith.addf %517, %521 : vector<16x16xf32>
      %523 = arith.negf %522 : vector<16x16xf32>
      %524 = math.exp %523 : vector<16x16xf32>
      %cst_16 = arith.constant 1.000000e+00 : f32
      %525 = vector.broadcast %cst_16 : f32 to vector<16x16xf32>
      %526 = arith.addf %525, %524 : vector<16x16xf32>
      %527 = arith.divf %525, %526 : vector<16x16xf32>
      %c0_17 = arith.constant 0 : index
      %c0_18 = arith.constant 0 : index
      %c0_19 = arith.constant 0 : index
      %c0_20 = arith.constant 0 : index
      %528 = vector.load %arg4[%c0_17, %c0_18, %c0_19, %c0_20] : memref<1x1x16x16xf32, #tpu.memory_space<vmem>>, vector<1x1x16x16xf32>
      %529 = vector.shape_cast %528 : vector<1x1x16x16xf32> to vector<16x16xf32>
      %530 = vector.shape_cast %527 : vector<16x16xf32> to vector<1x1x16x16xf32>
      tpu.vector_store %arg4[%c0_17, %c0_18, %c0_19, %c0_20], %530 {strides = array<i32>} : memref<1x1x16x16xf32, #tpu.memory_space<vmem>>, vector<1x1x16x16xf32>,
    } else {
    }
    return
  }
  func.func @transform_0(%arg0: i32, %arg1: i32) -> i32 {
    %c0_i32 = arith.constant 0 : i32
    %c0_i32_0 = arith.constant 0 : i32
    return %c0_i32 : i32
  }
  func.func @transform_1(%arg0: i32, %arg1: i32) -> (i32, i32, i32, i32) {
    %c0_i32 = arith.constant 0 : i32
    %c0_i32_0 = arith.constant 0 : i32
    %c0_i32_1 = arith.constant 0 : i32
    return %arg0, %arg1, %c0_i32, %c0_i32_0 : i32, i32, i32, i32
  }
  func.func @transform_2(%arg0: i32, %arg1: i32) -> (i32, i32, i32, i32) {
    %c0_i32 = arith.constant 0 : i32
    %c0_i32_0 = arith.constant 0 : i32
    %c0_i32_1 = arith.constant 0 : i32
    %c0_i32_2 = arith.constant 0 : i32
    return %arg0, %c0_i32, %c0_i32_0, %c0_i32_1 : i32, i32, i32, i32
  }
}

</mosaic_0001>

<llo_original>
// kernel: tpu_custom_call.1
$region0: #{tpu_custom_call.1}
  #allocation0 [shape = 'u32[]', space=smem, size = 0x4, offset = 0x4, fixed_abs, tag = 'smem constant byte address 0x4 - core index']
  #allocation1 [shape = 'u32[144,128]{1,0:T(1,128)}', space=vmem, size = 0x12000, scoped, tag = 'internal scratch']
  #allocation2 [shape = 'f32[2,22,22]{2,1,0:T(8,128)}', space=vmem, size = 0x6000, scoped, tag = 'scratch operand']
  %s0 = inlined_call_operand.hbm [shape: f32[99], index: 0, kind: input, shape index: {}]
  %s1 = inlined_call_operand.hbm [shape: f32[2,4,16,16], index: 1, kind: input, shape index: {}]
  %s2 = inlined_call_operand.hbm [shape: f32[2,1,16,16], index: 2, kind: output, shape index: {}]
  %s3 = sld [smem:[#allocation0]]
  $region61: #{tpu_custom_call.1} parent=0
    _
  %s5 = ssub.s32 1, %s3
  %s6 = scalar_select 0, %s5, %s3
  $region1: #{tpu_custom_call.1} parent=0
    #allocation3 [shape = 'u8[512]{0}', space=smem, size = 0x200, scoped, tag = 'input window, operand 0, single buffered']
    #allocation4 [shape = 's32[2]{0}', space=sflag, size = 0x8, scoped, tag = 'scoped memory for tpu_custom_call.1']
    #allocation5 [shape = 's32[2]{0}', space=sflag, size = 0x8, scoped, tag = 'scoped memory for tpu_custom_call.1']
    #allocation6 [shape = 's32[2]{0}', space=sflag, size = 0x8, scoped, tag = 'scoped memory for tpu_custom_call.1']
    #allocation7 [shape = 'u8[65536]{0}', space=vmem, size = 0x10000, scoped, tag = 'input window, operand 1']
    #allocation8 [shape = 'u8[16384]{0}', space=vmem, size = 0x4000, scoped, tag = 'output window, operand 0']
    %7 = vsyncpa [#allocation6], 0
    %8 = vsyncpa [#allocation4], 0
    %s9 = scalar_lea.sflag [#allocation4], 1
    %10 = vsyncpa %s9, 0
    %11 = vsyncpa [#allocation5], 0
    %s12 = scalar_lea.sflag [#allocation5], 1
    %13 = vsyncpa %s12, 0
    loop: start=0, step=1, limit=4
    $region2: #{tpu_custom_call.1} parent=1 // loop_pre_header
      _
    $region3: #{tpu_custom_call.1} parent=1 // loop_header
      %s15 = sphi 0, %s19
      %p16 = scmp.ge.s32.totalorder %s15, 4
      %s22 = sphi 0, %s34
      %s23 = sphi 0, %s30
      %s24 = sphi 0, %s22
      %s25 = sphi 0, %s23
      %s26 = sphi 0, %s24
      %s27 = sphi 0, %s25
      %s35 = sphi 0, %s35
      %s37 = sphi 0, %s35
      %s38 = sphi 0, %s37
      %s52 = sphi 0, %s38
      %s60 = sphi 0, %s62
      %s63 = sphi 0, %s60
      %s64 = sphi 0, %s63
      %s80 = sphi 0, %s64
      %s86 = sphi 0, %s88
      %s89 = sphi 0, %s86
      %s90 = sphi 0, %s89
      %s106 = sphi 0, %s90
    $region4: #{tpu_custom_call.1} parent=1 // loop_header_branch
      %18 = sbr.rel (%p16) target = $region8
    $region5: #{tpu_custom_call.1} parent=1 // loop_body
      %s20 = ssub.s32 %s15, 1
      %s21 = ssub.s32 %s15, 2
      %s28 = sadd.s32 1, %s23
      %p29 = scmp.ge.s32.totalorder %s28, 1
      %s30 = scalar_select %p29, 0, %s28
      %s31 = sadd.s32 1, %s22
      %s32 = scalar_select %p29, %s31, %s22
      %p33 = scmp.ge.s32.totalorder %s32, 2
      %s34 = scalar_select %p33, 0, %s32
      %s36 = sadd.s32 %s35, 1
      %p39 = scmp.eq.s32.totalorder %s15, 1
      %p40 = scmp.ne.s32.totalorder %s35, %s37
      %p41 = scmp.eq.s32.totalorder %s15, 0
      %p42 = por %p40, %p41
      %p43 = scmp.ne.s32.totalorder %s35, %s37
      %p44 = scmp.eq.s32.totalorder %s20, 1
      %p45 = por %p43, %p44
      %p46 = scmp.ne.s32.totalorder %s37, %s38
      %p47 = scmp.eq.s32.totalorder %s20, 0
      %p48 = por %p46, %p47
      %p49 = scmp.ne.s32.totalorder %s37, %s38
      %p50 = scmp.eq.s32.totalorder %s21, 1
      %p51 = por %p49, %p50
      %p53 = scmp.ne.s32.totalorder %s38, %s52
      %p54 = scmp.eq.s32.totalorder %s21, 0
      %p55 = por %p53, %p54
      %s56 = ssub.s32 %s22, %s34
      %s57 = ssub.s32 %s23, %s30
      %s58 = sor.u32 %s56, %s57
      %p59 = scmp.eq.s32.totalorder %s58, 0
      %s61 = sadd.s32 %s60, 1
      %s62 = scalar_select %p59, %s60, %s61
      %p65 = pneg %p59
      %p66 = scmp.eq.s32.totalorder %s15, 1
      %p67 = por %p65, %p66
      %p68 = scmp.ne.s32.totalorder %s60, %s63
      %p69 = scmp.eq.s32.totalorder %s15, 0
      %p70 = por %p68, %p69
      %p71 = scmp.ne.s32.totalorder %s60, %s63
      %p72 = scmp.eq.s32.totalorder %s20, 1
      %p73 = por %p71, %p72
      %p74 = scmp.ne.s32.totalorder %s63, %s64
      %p75 = scmp.eq.s32.totalorder %s20, 0
      %p76 = por %p74, %p75
      %p77 = scmp.ne.s32.totalorder %s63, %s64
      %p78 = scmp.eq.s32.totalorder %s21, 1
      %p79 = por %p77, %p78
      %p81 = scmp.ne.s32.totalorder %s64, %s80
      %p82 = scmp.eq.s32.totalorder %s21, 0
      %p83 = por %p81, %p82
      %s84 = ssub.s32 %s22, %s34
      %p85 = scmp.eq.s32.totalorder %s84, 0
      %s87 = sadd.s32 %s86, 1
      %s88 = scalar_select %p85, %s86, %s87
      %p91 = pneg %p85
      %p92 = scmp.eq.s32.totalorder %s15, 1
      %p93 = por %p91, %p92
      %p94 = scmp.ne.s32.totalorder %s86, %s89
      %p95 = scmp.eq.s32.totalorder %s15, 0
      %p96 = por %p94, %p95
      %p97 = scmp.ne.s32.totalorder %s86, %s89
      %p98 = scmp.eq.s32.totalorder %s20, 1
      %p99 = por %p97, %p98
      %p100 = scmp.ne.s32.totalorder %s89, %s90
      %p101 = scmp.eq.s32.totalorder %s20, 0
      %p102 = por %p100, %p101
      %p103 = scmp.ne.s32.totalorder %s89, %s90
      %p104 = scmp.eq.s32.totalorder %s21, 1
      %p105 = por %p103, %p104
      %p107 = scmp.ne.s32.totalorder %s90, %s106
      %p108 = scmp.eq.s32.totalorder %s21, 0
      %p109 = por %p107, %p108
      %p110 = scmp.le.s32.totalorder 1, %s15
      %p111 = scmp.lt.s32.totalorder %s15, 3
      %p112 = pnand %p110, %p111
      %p113 = pneg %p112
      // Predicated region
      $region9: #{tpu_custom_call.1} parent=5 // pred_check
        _
      $region10: #{tpu_custom_call.1} parent=5 // pred_check_branch
        %115 = sbr.rel (%p112) target = $region12
      $region11: #{tpu_custom_call.1} parent=5 // pred_region
        %s116 = ssub.s32 %s15, 1
        // Predicated region
        $region13: #{tpu_custom_call.1} parent=11 // pred_check
          %p117 = pneg %p48
        $region14: #{tpu_custom_call.1} parent=11 // pred_check_branch
          %119 = sbr.rel (%p117) target = $region16
        $region15: #{tpu_custom_call.1} parent=11 // pred_region
          %s121 = ssub.s32 16, 16
          %122 = vsyncadd [#allocation6], %s121
          %125 = dma.hbm_to_smem %s0, 16, [#allocation3], [#allocation6]
        $region16: #{tpu_custom_call.1} parent=11 // pred_fallthru
          _
      $region12: #{tpu_custom_call.1} parent=5 // pred_fallthru
        _
      %p126 = scmp.lt.s32.totalorder %s15, 2
      // Predicated region
      $region17: #{tpu_custom_call.1} parent=5 // pred_check
        %p127 = pneg %p126
      $region18: #{tpu_custom_call.1} parent=5 // pred_check_branch
        %129 = sbr.rel (%p127) target = $region20
      $region19: #{tpu_custom_call.1} parent=5 // pred_region
        // Predicated region
        $region21: #{tpu_custom_call.1} parent=19 // pred_check
          %p130 = pneg %p70
        $region22: #{tpu_custom_call.1} parent=19 // pred_check_branch
          %132 = sbr.rel (%p130) target = $region24
        $region23: #{tpu_custom_call.1} parent=19 // pred_region
          %s133 = sand.u32 %s60, 1
          %s134 = scalar_lea.sflag [#allocation4], %s133
          %s135 = sand.u32 %s60, 1
          %s136 = smul.addr %s135, 64
          %s137 = scalar_lea.vmem [#allocation7], %s136
          %s138 = smul.u32 4, %s23
          %s140 = ssub.s32 1024, 1024
          %141 = vsyncadd %s134, %s140
          %s142 = smul.addr %s138, 2
          %s143 = smul.addr %s22, 8
          %s144 = sadd.s32 %s142, %s143
          %s145 = smul.addr %s144, 128
          %s146 = scalar_lea.hbm %s1, %s145
          %s147 = sshll.u32 %s137, 4
          %s148 = int_to_ptr.vmem [resolvable:$true] %s147
          %153 = dma.hbm_to_vmem [thread:$0]  %s146, 1024, %s148, %s134, 128, 128, 8
        $region24: #{tpu_custom_call.1} parent=19 // pred_fallthru
          _
      $region20: #{tpu_custom_call.1} parent=5 // pred_fallthru
        _
      %p154 = scmp.le.s32.totalorder 1, %s15
      %p155 = scmp.lt.s32.totalorder %s15, 3
      %p156 = pnand %p154, %p155
      %p157 = pneg %p156
      // Predicated region
      $region25: #{tpu_custom_call.1} parent=5 // pred_check
        _
      $region26: #{tpu_custom_call.1} parent=5 // pred_check_branch
        %159 = sbr.rel (%p156) target = $region28
      $region27: #{tpu_custom_call.1} parent=5 // pred_region
        %s160 = ssub.s32 %s15, 1
        // Predicated region
        $region29: #{tpu_custom_call.1} parent=27 // pred_check
          %p161 = pneg %p48
        $region30: #{tpu_custom_call.1} parent=27 // pred_check_branch
          %163 = sbr.rel (%p161) target = $region32
        $region31: #{tpu_custom_call.1} parent=27 // pred_region
          %164 = dma.done [#allocation6], 16
        $region32: #{tpu_custom_call.1} parent=27 // pred_fallthru
          _
        %s165 = sand.u32 %s63, 1
        %s166 = scalar_lea.sflag [#allocation4], %s165
        %s167 = sand.u32 %s63, 1
        %s168 = smul.addr %s167, 64
        %s169 = scalar_lea.vmem [#allocation7], %s168
        // Predicated region
        $region33: #{tpu_custom_call.1} parent=27 // pred_check
          %p170 = pneg %p76
        $region34: #{tpu_custom_call.1} parent=27 // pred_check_branch
          %172 = sbr.rel (%p170) target = $region36
        $region35: #{tpu_custom_call.1} parent=27 // pred_region
          %173 = dma.done %s166, 1024
        $region36: #{tpu_custom_call.1} parent=27 // pred_fallthru
          _
        %174 = sfence
        %p175 = pneg %p48
        %p176 = pneg %p45
        %s177 = sand.u32 %s63, 1
        %s178 = scalar_lea.sflag [#allocation4], %s177
        %s179 = sand.u32 %s63, 1
        %s180 = smul.addr %s179, 64
        %s181 = scalar_lea.vmem [#allocation7], %s180
        %p182 = pneg %p76
        %p183 = pneg %p73
        %p184 = pneg %p102
        %p185 = pneg %p99
        %s186 = sand.u32 %s89, 1
        %s187 = scalar_lea.sflag [#allocation5], %s186
        %s188 = sand.u32 %s89, 1
        %s189 = smul.addr %s188, 16
        %s190 = scalar_lea.vmem [#allocation8], %s189
        %s191 = smul.u32 4, %s25
        %v192 = vld [vmem:[%s169] sm:$0xff]
        %v193 = vld [vmem:[%s169 + $0x8] sm:$0xff]
        %v194 = vld [vmem:[%s169 + $0x10] sm:$0xff]
        %v195 = vld [vmem:[%s169 + $0x18] sm:$0xff]
        %v196 = vld [vmem:[%s169 + $0x20] sm:$0xff]
        %v197 = vld [vmem:[%s169 + $0x28] sm:$0xff]
        %v198 = vld [vmem:[%s169 + $0x30] sm:$0xff]
        %v199 = vld [vmem:[%s169 + $0x38] sm:$0xff]
        %vm200 = vcmask 130048
        %v201 = vsel %vm200, %v192, -inf
        %v202 = vsel %vm200, %v194, -inf
        %v203 = vsel %vm200, %v196, -inf
        %v204 = vmax.f32 %v201, %v203
        %v205 = vsel %vm200, %v198, -inf
        %v206 = vmax.f32 %v202, %v205
        %v207 = vmax.f32 %v204, %v206
        %v208 = vsel %vm200, %v193, -inf
        %v209 = vsel %vm200, %v195, -inf
        %v210 = vsel %vm200, %v197, -inf
        %v211 = vmax.f32 %v208, %v210
        %v212 = vsel %vm200, %v199, -inf
        %v213 = vmax.f32 %v209, %v212
        %v214 = vmax.f32 %v211, %v213
        %v215 = vsel %vm200, %v192, 0.0
        %v216 = vsel %vm200, %v194, 0.0
        %v217 = vadd.f32 %v215, %v216
        %v218 = vsel %vm200, %v196, 0.0
        %v219 = vadd.f32 %v217, %v218
        %v220 = vsel %vm200, %v198, 0.0
        %v221 = vadd.f32 %v219, %v220
        %v222 = vsel %vm200, %v193, 0.0
        %v223 = vsel %vm200, %v195, 0.0
        %v224 = vadd.f32 %v222, %v223
        %v225 = vsel %vm200, %v197, 0.0
        %v226 = vadd.f32 %v224, %v225
        %v227 = vsel %vm200, %v199, 0.0
        %v228 = vadd.f32 %v226, %v227
        %p229 = scmp.eq.s32.totalorder %s25, 0
        // Predicated region
        $region37: #{tpu_custom_call.1} parent=27 // pred_check
          %p230 = pneg %p229
        $region38: #{tpu_custom_call.1} parent=27 // pred_check_branch
          %232 = sbr.rel (%p230) target = $region40
        $region39: #{tpu_custom_call.1} parent=27 // pred_region
          %vm233 = vcmask 179200
          %234 = vst.msk [vmem:[#allocation2] sm:$0xff] %vm233, 0.0
          %235 = vst.msk [vmem:[#allocation2 + $0x8] sm:$0xff] %vm233, 0.0
          %vm236 = vcmask 177152
          %237 = vst.msk [vmem:[#allocation2 + $0x10] sm:$0x3f] %vm236, 0.0
          %238 = vst.msk [vmem:[#allocation2 + $0x18] sm:$0xff] %vm233, 0.0
          %239 = vst.msk [vmem:[#allocation2 + $0x20] sm:$0xff] %vm233, 0.0
          %240 = vst.msk [vmem:[#allocation2 + $0x28] sm:$0x3f] %vm236, 0.0
          %243 = vrot.lane.b32.xlu0 %v207, 3
          %v244 = vpop.permute.xlu0 %243
          %245 = vrot.lane.b32.xlu0 %v214, 3
          %v246 = vpop.permute.xlu0 %245
          %vm249 = vcmask 154648
          %250 = vst.msk [vmem:[#allocation2 + $0x3] sm:$0xff] %vm249, %v244
          %251 = vst.msk [vmem:[#allocation2 + $0xb] sm:$0xff] %vm249, %v246
          %254 = vrot.lane.b32.xlu0 %v221, 3
          %v255 = vpop.permute.xlu0 %254
          %256 = vrot.lane.b32.xlu0 %v228, 3
          %v257 = vpop.permute.xlu0 %256
          %s260 = scalar_lea.vmem [#allocation2], 24
          %261 = vst.msk [vmem:[%s260 + $0x3] sm:$0xff] %vm249, %v255
          %262 = vst.msk [vmem:[%s260 + $0xb] sm:$0xff] %vm249, %v257
        $region40: #{tpu_custom_call.1} parent=27 // pred_fallthru
          _
        %p263 = scmp.gt.s32.totalorder %s25, 0
        // Predicated region
        $region41: #{tpu_custom_call.1} parent=27 // pred_check
          %p264 = pneg %p263
        $region42: #{tpu_custom_call.1} parent=27 // pred_check_branch
          %266 = sbr.rel (%p264) target = $region44
        $region43: #{tpu_custom_call.1} parent=27 // pred_region
          %v267 = vld [vmem:[#allocation2 + $0x3] sm:$0xff]
          %v268 = vld [vmem:[#allocation2 + $0xb] sm:$0xff]
          %271 = vrot.lane.b32.xlu0 %v207, 3
          %v272 = vpop.permute.xlu0 %271
          %273 = vrot.lane.b32.xlu0 %v214, 3
          %v274 = vpop.permute.xlu0 %273
          %v277 = vmax.f32 %v267, %v272
          %v278 = vmax.f32 %v268, %v274
          %vm279 = vcmask 154648
          %280 = vst.msk [vmem:[#allocation2 + $0x3] sm:$0xff] %vm279, %v277
          %281 = vst.msk [vmem:[#allocation2 + $0xb] sm:$0xff] %vm279, %v278
          %s282 = scalar_lea.vmem [#allocation2], 24
          %v283 = vld [vmem:[%s282 + $0x3] sm:$0xff]
          %v284 = vld [vmem:[%s282 + $0xb] sm:$0xff]
          %287 = vrot.lane.b32.xlu0 %v221, 3
          %v288 = vpop.permute.xlu0 %287
          %289 = vrot.lane.b32.xlu0 %v228, 3
          %v290 = vpop.permute.xlu0 %289
          %v293 = vadd.f32 %v283, %v288
          %v294 = vadd.f32 %v284, %v290
          %295 = vst.msk [vmem:[%s282 + $0x3] sm:$0xff] %vm279, %v293
          %296 = vst.msk [vmem:[%s282 + $0xb] sm:$0xff] %vm279, %v294
        $region44: #{tpu_custom_call.1} parent=27 // pred_fallthru
          _
        // Predicated region
        $region45: #{tpu_custom_call.1} parent=27 // pred_check
          %p297 = pneg %p229
        $region46: #{tpu_custom_call.1} parent=27 // pred_check_branch
          %299 = sbr.rel (%p297) target = $region48
        $region47: #{tpu_custom_call.1} parent=27 // pred_region
          %v300 = vld [vmem:[#allocation2] sm:$0xff]
          %v301 = vld [vmem:[#allocation2 + $0x8] sm:$0xff]
          %v302 = vld [vmem:[#allocation2 + $0x10] sm:$0x3f]
          %s303 = scalar_lea.vmem [#allocation2], 24
          %v304 = vld [vmem:[%s303] sm:$0xff]
          %v305 = vld [vmem:[%s303 + $0x8] sm:$0xff]
          %v306 = vld [vmem:[%s303 + $0x10] sm:$0x3f]
          %s307 = sld [smem:[#allocation3 + $0x62]]
          %v308 = vstv %s307
          %s309 = sld [smem:[#allocation3]]
          %v310 = vstv %s309
          %v311 = vmul.f32 %v310, %v300
          %v312 = vmul.f32 %v310, %v301
          %v313 = vadd.f32 %v308, %v311
          %v314 = vadd.f32 %v308, %v312
          %s315 = sld [smem:[#allocation3 + $0x31]]
          %v316 = vstv %s315
          %v317 = vmul.f32 %v316, %v304
          %v318 = vmul.f32 %v316, %v305
          %v319 = vadd.f32 %v313, %v317
          %v320 = vadd.f32 %v314, %v318
          %s321 = sld [smem:[#allocation3 + $0x7]]
          %v322 = vstv %s321
          %v323 = vmul.f32 %v322, %v300
          %v324 = vmul.f32 %v322, %v301
          %v325 = vmul.f32 %v322, %v302
          %vm329 = vcmask 1046528
          %v330 = vrot.slane %v323, 1
          %v331 = vrot.slane %v324, 1
          %v332 = vsel %vm329, %v330, %v331
          %v333 = vrot.slane %v325, 1
          %v334 = vsel %vm329, %v331, %v333
          %v337 = vadd.f32 %v319, %v332
          %v338 = vadd.f32 %v320, %v334
          %s339 = sld [smem:[#allocation3 + $0x38]]
          %v340 = vstv %s339
          %v341 = vmul.f32 %v340, %v304
          %v342 = vmul.f32 %v340, %v305
          %v343 = vmul.f32 %v340, %v306
          %v347 = vrot.slane %v341, 1
          %v348 = vrot.slane %v342, 1
          %v349 = vsel %vm329, %v347, %v348
          %v350 = vrot.slane %v343, 1
          %v351 = vsel %vm329, %v348, %v350
          %v354 = vadd.f32 %v337, %v349
          %v355 = vadd.f32 %v338, %v351
          %s356 = sld [smem:[#allocation3 + $0xe]]
          %v357 = vstv %s356
          %v358 = vmul.f32 %v357, %v300
          %v359 = vmul.f32 %v357, %v301
          %v360 = vmul.f32 %v357, %v302
          %vm364 = vcmask 1045504
          %v365 = vrot.slane %v358, 2
          %v366 = vrot.slane %v359, 2
          %v367 = vsel %vm364, %v365, %v366
          %v368 = vrot.slane %v360, 2
          %v369 = vsel %vm364, %v366, %v368
          %v372 = vadd.f32 %v354, %v367
          %v373 = vadd.f32 %v355, %v369
          %s374 = sld [smem:[#allocation3 + $0x3f]]
          %v375 = vstv %s374
          %v376 = vmul.f32 %v375, %v304
          %v377 = vmul.f32 %v375, %v305
          %v378 = vmul.f32 %v375, %v306
          %v382 = vrot.slane %v376, 2
          %v383 = vrot.slane %v377, 2
          %v384 = vsel %vm364, %v382, %v383
          %v385 = vrot.slane %v378, 2
          %v386 = vsel %vm364, %v383, %v385
          %v389 = vadd.f32 %v372, %v384
          %v390 = vadd.f32 %v373, %v386
          %s391 = sld [smem:[#allocation3 + $0x15]]
          %v392 = vstv %s391
          %v393 = vmul.f32 %v392, %v300
          %v394 = vmul.f32 %v392, %v301
          %v395 = vmul.f32 %v392, %v302
          %vm399 = vcmask 1044480
          %v400 = vrot.slane %v393, 3
          %v401 = vrot.slane %v394, 3
          %v402 = vsel %vm399, %v400, %v401
          %v403 = vrot.slane %v395, 3
          %v404 = vsel %vm399, %v401, %v403
          %v407 = vadd.f32 %v389, %v402
          %v408 = vadd.f32 %v390, %v404
          %s409 = sld [smem:[#allocation3 + $0x46]]
          %v410 = vstv %s409
          %v411 = vmul.f32 %v410, %v304
          %v412 = vmul.f32 %v410, %v305
          %v413 = vmul.f32 %v410, %v306
          %v417 = vrot.slane %v411, 3
          %v418 = vrot.slane %v412, 3
          %v419 = vsel %vm399, %v417, %v418
          %v420 = vrot.slane %v413, 3
          %v421 = vsel %vm399, %v418, %v420
          %v424 = vadd.f32 %v407, %v419
          %v425 = vadd.f32 %v408, %v421
          %s426 = sld [smem:[#allocation3 + $0x1c]]
          %v427 = vstv %s426
          %v428 = vmul.f32 %v427, %v300
          %v429 = vmul.f32 %v427, %v301
          %v430 = vmul.f32 %v427, %v302
          %vm434 = vcmask 1043456
          %v435 = vrot.slane %v428, 4
          %v436 = vrot.slane %v429, 4
          %v437 = vsel %vm434, %v435, %v436
          %v438 = vrot.slane %v430, 4
          %v439 = vsel %vm434, %v436, %v438
          %v442 = vadd.f32 %v424, %v437
          %v443 = vadd.f32 %v425, %v439
          %s444 = sld [smem:[#allocation3 + $0x4d]]
          %v445 = vstv %s444
          %v446 = vmul.f32 %v445, %v304
          %v447 = vmul.f32 %v445, %v305
          %v448 = vmul.f32 %v445, %v306
          %v452 = vrot.slane %v446, 4
          %v453 = vrot.slane %v447, 4
          %v454 = vsel %vm434, %v452, %v453
          %v455 = vrot.slane %v448, 4
          %v456 = vsel %vm434, %v453, %v455
          %v459 = vadd.f32 %v442, %v454
          %v460 = vadd.f32 %v443, %v456
          %s461 = sld [smem:[#allocation3 + $0x23]]
          %v462 = vstv %s461
          %v463 = vmul.f32 %v462, %v300
          %v464 = vmul.f32 %v462, %v301
          %v465 = vmul.f32 %v462, %v302
          %vm469 = vcmask 1042432
          %v470 = vrot.slane %v463, 5
          %v471 = vrot.slane %v464, 5
          %v472 = vsel %vm469, %v470, %v471
          %v473 = vrot.slane %v465, 5
          %v474 = vsel %vm469, %v471, %v473
          %v477 = vadd.f32 %v459, %v472
          %v478 = vadd.f32 %v460, %v474
          %s479 = sld [smem:[#allocation3 + $0x54]]
          %v480 = vstv %s479
          %v481 = vmul.f32 %v480, %v304
          %v482 = vmul.f32 %v480, %v305
          %v483 = vmul.f32 %v480, %v306
          %v487 = vrot.slane %v481, 5
          %v488 = vrot.slane %v482, 5
          %v489 = vsel %vm469, %v487, %v488
          %v490 = vrot.slane %v483, 5
          %v491 = vsel %vm469, %v488, %v490
          %v494 = vadd.f32 %v477, %v489
          %v495 = vadd.f32 %v478, %v491
          %s496 = sld [smem:[#allocation3 + $0x2a]]
          %v497 = vstv %s496
          %v498 = vmul.f32 %v497, %v300
          %v499 = vmul.f32 %v497, %v301
          %v500 = vmul.f32 %v497, %v302
          %vm504 = vcmask 1041408
          %v505 = vrot.slane %v498, 6
          %v506 = vrot.slane %v499, 6
          %v507 = vsel %vm504, %v505, %v506
          %v508 = vrot.slane %v500, 6
          %v509 = vsel %vm504, %v506, %v508
          %v512 = vadd.f32 %v494, %v507
          %v513 = vadd.f32 %v495, %v509
          %s514 = sld [smem:[#allocation3 + $0x5b]]
          %v515 = vstv %s514
          %v516 = vmul.f32 %v515, %v304
          %v517 = vmul.f32 %v515, %v305
          %v518 = vmul.f32 %v515, %v306
          %v522 = vrot.slane %v516, 6
          %v523 = vrot.slane %v517, 6
          %v524 = vsel %vm504, %v522, %v523
          %v525 = vrot.slane %v518, 6
          %v526 = vsel %vm504, %v523, %v525
          %v529 = vadd.f32 %v512, %v524
          %v530 = vadd.f32 %v513, %v526
          %s531 = sld [smem:[#allocation3 + $0x1]]
          %v532 = vstv %s531
          %v533 = vmul.f32 %v532, %v300
          %v534 = vmul.f32 %v532, %v301
          %537 = vrot.lane.b32.xlu0 %v533, 127
          %v538 = vpop.permute.xlu0 %537
          %539 = vrot.lane.b32.xlu0 %v534, 127
          %v540 = vpop.permute.xlu0 %539
          %v543 = vadd.f32 %v529, %v538
          %v544 = vadd.f32 %v530, %v540
          %s545 = sld [smem:[#allocation3 + $0x32]]
          %v546 = vstv %s545
          %v547 = vmul.f32 %v546, %v304
          %v548 = vmul.f32 %v546, %v305
          %551 = vrot.lane.b32.xlu0 %v547, 127
          %v552 = vpop.permute.xlu0 %551
          %553 = vrot.lane.b32.xlu0 %v548, 127
          %v554 = vpop.permute.xlu0 %553
          %v557 = vadd.f32 %v543, %v552
          %v558 = vadd.f32 %v544, %v554
          %s559 = sld [smem:[#allocation3 + $0x8]]
          %v560 = vstv %s559
          %v561 = vmul.f32 %v560, %v300
          %v562 = vmul.f32 %v560, %v301
          %v563 = vmul.f32 %v560, %v302
          %v567 = vrot.slane %v561, 1
          %v568 = vrot.slane %v562, 1
          %v569 = vsel %vm329, %v567, %v568
          %v570 = vrot.slane %v563, 1
          %v571 = vsel %vm329, %v568, %v570
          %572 = vrot.lane.b32.xlu0 %v569, 127
          %v573 = vpop.permute.xlu0 %572
          %574 = vrot.lane.b32.xlu0 %v571, 127
          %v575 = vpop.permute.xlu0 %574
          %v578 = vadd.f32 %v557, %v573
          %v579 = vadd.f32 %v558, %v575
          %s580 = sld [smem:[#allocation3 + $0x39]]
          %v581 = vstv %s580
          %v582 = vmul.f32 %v581, %v304
          %v583 = vmul.f32 %v581, %v305
          %v584 = vmul.f32 %v581, %v306
          %v588 = vrot.slane %v582, 1
          %v589 = vrot.slane %v583, 1
          %v590 = vsel %vm329, %v588, %v589
          %v591 = vrot.slane %v584, 1
          %v592 = vsel %vm329, %v589, %v591
          %593 = vrot.lane.b32.xlu0 %v590, 127
          %v594 = vpop.permute.xlu0 %593
          %595 = vrot.lane.b32.xlu0 %v592, 127
          %v596 = vpop.permute.xlu0 %595
          %v599 = vadd.f32 %v578, %v594
          %v600 = vadd.f32 %v579, %v596
          %s601 = sld [smem:[#allocation3 + $0xf]]
          %v602 = vstv %s601
          %v603 = vmul.f32 %v602, %v300
          %v604 = vmul.f32 %v602, %v301
          %v605 = vmul.f32 %v602, %v302
          %v609 = vrot.slane %v603, 2
          %v610 = vrot.slane %v604, 2
          %v611 = vsel %vm364, %v609, %v610
          %v612 = vrot.slane %v605, 2
          %v613 = vsel %vm364, %v610, %v612
          %614 = vrot.lane.b32.xlu0 %v611, 127
          %v615 = vpop.permute.xlu0 %614
          %616 = vrot.lane.b32.xlu0 %v613, 127
          %v617 = vpop.permute.xlu0 %616
          %v620 = vadd.f32 %v599, %v615
          %v621 = vadd.f32 %v600, %v617
          %s622 = sld [smem:[#allocation3 + $0x40]]
          %v623 = vstv %s622
          %v624 = vmul.f32 %v623, %v304
          %v625 = vmul.f32 %v623, %v305
          %v626 = vmul.f32 %v623, %v306
          %v630 = vrot.slane %v624, 2
          %v631 = vrot.slane %v625, 2
          %v632 = vsel %vm364, %v630, %v631
          %v633 = vrot.slane %v626, 2
          %v634 = vsel %vm364, %v631, %v633
          %635 = vrot.lane.b32.xlu0 %v632, 127
          %v636 = vpop.permute.xlu0 %635
          %637 = vrot.lane.b32.xlu0 %v634, 127
          %v638 = vpop.permute.xlu0 %637
          %v641 = vadd.f32 %v620, %v636
          %v642 = vadd.f32 %v621, %v638
          %s643 = sld [smem:[#allocation3 + $0x16]]
          %v644 = vstv %s643
          %v645 = vmul.f32 %v644, %v300
          %v646 = vmul.f32 %v644, %v301
          %v647 = vmul.f32 %v644, %v302
          %v651 = vrot.slane %v645, 3
          %v652 = vrot.slane %v646, 3
          %v653 = vsel %vm399, %v651, %v652
          %v654 = vrot.slane %v647, 3
          %v655 = vsel %vm399, %v652, %v654
          %656 = vrot.lane.b32.xlu0 %v653, 127
          %v657 = vpop.permute.xlu0 %656
          %658 = vrot.lane.b32.xlu0 %v655, 127
          %v659 = vpop.permute.xlu0 %658
          %v662 = vadd.f32 %v641, %v657
          %v663 = vadd.f32 %v642, %v659
          %s664 = sld [smem:[#allocation3 + $0x47]]
          %v665 = vstv %s664
          %v666 = vmul.f32 %v665, %v304
          %v667 = vmul.f32 %v665, %v305
          %v668 = vmul.f32 %v665, %v306
          %v672 = vrot.slane %v666, 3
          %v673 = vrot.slane %v667, 3
          %v674 = vsel %vm399, %v672, %v673
          %v675 = vrot.slane %v668, 3
          %v676 = vsel %vm399, %v673, %v675
          %677 = vrot.lane.b32.xlu0 %v674, 127
          %v678 = vpop.permute.xlu0 %677
          %679 = vrot.lane.b32.xlu0 %v676, 127
          %v680 = vpop.permute.xlu0 %679
          %v683 = vadd.f32 %v662, %v678
          %v684 = vadd.f32 %v663, %v680
          %s685 = sld [smem:[#allocation3 + $0x1d]]
          %v686 = vstv %s685
          %v687 = vmul.f32 %v686, %v300
          %v688 = vmul.f32 %v686, %v301
          %v689 = vmul.f32 %v686, %v302
          %v693 = vrot.slane %v687, 4
          %v694 = vrot.slane %v688, 4
          %v695 = vsel %vm434, %v693, %v694
          %v696 = vrot.slane %v689, 4
          %v697 = vsel %vm434, %v694, %v696
          %698 = vrot.lane.b32.xlu0 %v695, 127
          %v699 = vpop.permute.xlu0 %698
          %700 = vrot.lane.b32.xlu0 %v697, 127
          %v701 = vpop.permute.xlu0 %700
          %v704 = vadd.f32 %v683, %v699
          %v705 = vadd.f32 %v684, %v701
          %s706 = sld [smem:[#allocation3 + $0x4e]]
          %v707 = vstv %s706
          %v708 = vmul.f32 %v707, %v304
          %v709 = vmul.f32 %v707, %v305
          %v710 = vmul.f32 %v707, %v306
          %v714 = vrot.slane %v708, 4
          %v715 = vrot.slane %v709, 4
          %v716 = vsel %vm434, %v714, %v715
          %v717 = vrot.slane %v710, 4
          %v718 = vsel %vm434, %v715, %v717
          %719 = vrot.lane.b32.xlu0 %v716, 127
          %v720 = vpop.permute.xlu0 %719
          %721 = vrot.lane.b32.xlu0 %v718, 127
          %v722 = vpop.permute.xlu0 %721
          %v725 = vadd.f32 %v704, %v720
          %v726 = vadd.f32 %v705, %v722
          %s727 = sld [smem:[#allocation3 + $0x24]]
          %v728 = vstv %s727
          %v729 = vmul.f32 %v728, %v300
          %v730 = vmul.f32 %v728, %v301
          %v731 = vmul.f32 %v728, %v302
          %v735 = vrot.slane %v729, 5
          %v736 = vrot.slane %v730, 5
          %v737 = vsel %vm469, %v735, %v736
          %v738 = vrot.slane %v731, 5
          %v739 = vsel %vm469, %v736, %v738
          %740 = vrot.lane.b32.xlu0 %v737, 127
          %v741 = vpop.permute.xlu0 %740
          %742 = vrot.lane.b32.xlu0 %v739, 127
          %v743 = vpop.permute.xlu0 %742
          %v746 = vadd.f32 %v725, %v741
          %v747 = vadd.f32 %v726, %v743
          %s748 = sld [smem:[#allocation3 + $0x55]]
          %v749 = vstv %s748
          %v750 = vmul.f32 %v749, %v304
          %v751 = vmul.f32 %v749, %v305
          %v752 = vmul.f32 %v749, %v306
          %v756 = vrot.slane %v750, 5
          %v757 = vrot.slane %v751, 5
          %v758 = vsel %vm469, %v756, %v757
          %v759 = vrot.slane %v752, 5
          %v760 = vsel %vm469, %v757, %v759
          %761 = vrot.lane.b32.xlu0 %v758, 127
          %v762 = vpop.permute.xlu0 %761
          %763 = vrot.lane.b32.xlu0 %v760, 127
          %v764 = vpop.permute.xlu0 %763
          %v767 = vadd.f32 %v746, %v762
          %v768 = vadd.f32 %v747, %v764
          %s769 = sld [smem:[#allocation3 + $0x2b]]
          %v770 = vstv %s769
          %v771 = vmul.f32 %v770, %v300
          %v772 = vmul.f32 %v770, %v301
          %v773 = vmul.f32 %v770, %v302
          %v777 = vrot.slane %v771, 6
          %v778 = vrot.slane %v772, 6
          %v779 = vsel %vm504, %v777, %v778
          %v780 = vrot.slane %v773, 6
          %v781 = vsel %vm504, %v778, %v780
          %782 = vrot.lane.b32.xlu0 %v779, 127
          %v783 = vpop.permute.xlu0 %782
          %784 = vrot.lane.b32.xlu0 %v781, 127
          %v785 = vpop.permute.xlu0 %784
          %v788 = vadd.f32 %v767, %v783
          %v789 = vadd.f32 %v768, %v785
          %s790 = sld [smem:[#allocation3 + $0x5c]]
          %v791 = vstv %s790
          %v792 = vmul.f32 %v791, %v304
          %v793 = vmul.f32 %v791, %v305
          %v794 = vmul.f32 %v791, %v306
          %v798 = vrot.slane %v792, 6
          %v799 = vrot.slane %v793, 6
          %v800 = vsel %vm504, %v798, %v799
          %v801 = vrot.slane %v794, 6
          %v802 = vsel %vm504, %v799, %v801
          %803 = vrot.lane.b32.xlu0 %v800, 127
          %v804 = vpop.permute.xlu0 %803
          %805 = vrot.lane.b32.xlu0 %v802, 127
          %v806 = vpop.permute.xlu0 %805
          %v809 = vadd.f32 %v788, %v804
          %v810 = vadd.f32 %v789, %v806
          %s811 = sld [smem:[#allocation3 + $0x2]]
          %v812 = vstv %s811
          %v813 = vmul.f32 %v812, %v300
          %v814 = vmul.f32 %v812, %v301
          %817 = vrot.lane.b32.xlu0 %v813, 126
          %v818 = vpop.permute.xlu0 %817
          %819 = vrot.lane.b32.xlu0 %v814, 126
          %v820 = vpop.permute.xlu0 %819
          %v823 = vadd.f32 %v809, %v818
          %v824 = vadd.f32 %v810, %v820
          %s825 = sld [smem:[#allocation3 + $0x33]]
          %v826 = vstv %s825
          %v827 = vmul.f32 %v826, %v304
          %v828 = vmul.f32 %v826, %v305
          %831 = vrot.lane.b32.xlu0 %v827, 126
          %v832 = vpop.permute.xlu0 %831
          %833 = vrot.lane.b32.xlu0 %v828, 126
          %v834 = vpop.permute.xlu0 %833
          %v837 = vadd.f32 %v823, %v832
          %v838 = vadd.f32 %v824, %v834
          %s839 = sld [smem:[#allocation3 + $0x9]]
          %v840 = vstv %s839
          %v841 = vmul.f32 %v840, %v300
          %v842 = vmul.f32 %v840, %v301
          %v843 = vmul.f32 %v840, %v302
          %v847 = vrot.slane %v841, 1
          %v848 = vrot.slane %v842, 1
          %v849 = vsel %vm329, %v847, %v848
          %v850 = vrot.slane %v843, 1
          %v851 = vsel %vm329, %v848, %v850
          %852 = vrot.lane.b32.xlu0 %v849, 126
          %v853 = vpop.permute.xlu0 %852
          %854 = vrot.lane.b32.xlu0 %v851, 126
          %v855 = vpop.permute.xlu0 %854
          %v858 = vadd.f32 %v837, %v853
          %v859 = vadd.f32 %v838, %v855
          %s860 = sld [smem:[#allocation3 + $0x3a]]
          %v861 = vstv %s860
          %v862 = vmul.f32 %v861, %v304
          %v863 = vmul.f32 %v861, %v305
          %v864 = vmul.f32 %v861, %v306
          %v868 = vrot.slane %v862, 1
          %v869 = vrot.slane %v863, 1
          %v870 = vsel %vm329, %v868, %v869
          %v871 = vrot.slane %v864, 1
          %v872 = vsel %vm329, %v869, %v871
          %873 = vrot.lane.b32.xlu0 %v870, 126
          %v874 = vpop.permute.xlu0 %873
          %875 = vrot.lane.b32.xlu0 %v872, 126
          %v876 = vpop.permute.xlu0 %875
          %v879 = vadd.f32 %v858, %v874
          %v880 = vadd.f32 %v859, %v876
          %s881 = sld [smem:[#allocation3 + $0x10]]
          %v882 = vstv %s881
          %v883 = vmul.f32 %v882, %v300
          %v884 = vmul.f32 %v882, %v301
          %v885 = vmul.f32 %v882, %v302
          %v889 = vrot.slane %v883, 2
          %v890 = vrot.slane %v884, 2
          %v891 = vsel %vm364, %v889, %v890
          %v892 = vrot.slane %v885, 2
          %v893 = vsel %vm364, %v890, %v892
          %894 = vrot.lane.b32.xlu0 %v891, 126
          %v895 = vpop.permute.xlu0 %894
          %896 = vrot.lane.b32.xlu0 %v893, 126
          %v897 = vpop.permute.xlu0 %896
          %v900 = vadd.f32 %v879, %v895
          %v901 = vadd.f32 %v880, %v897
          %s902 = sld [smem:[#allocation3 + $0x41]]
          %v903 = vstv %s902
          %v904 = vmul.f32 %v903, %v304
          %v905 = vmul.f32 %v903, %v305
          %v906 = vmul.f32 %v903, %v306
          %v910 = vrot.slane %v904, 2
          %v911 = vrot.slane %v905, 2
          %v912 = vsel %vm364, %v910, %v911
          %v913 = vrot.slane %v906, 2
          %v914 = vsel %vm364, %v911, %v913
          %915 = vrot.lane.b32.xlu0 %v912, 126
          %v916 = vpop.permute.xlu0 %915
          %917 = vrot.lane.b32.xlu0 %v914, 126
          %v918 = vpop.permute.xlu0 %917
          %v921 = vadd.f32 %v900, %v916
          %v922 = vadd.f32 %v901, %v918
          %s923 = sld [smem:[#allocation3 + $0x17]]
          %v924 = vstv %s923
          %v925 = vmul.f32 %v924, %v300
          %v926 = vmul.f32 %v924, %v301
          %v927 = vmul.f32 %v924, %v302
          %v931 = vrot.slane %v925, 3
          %v932 = vrot.slane %v926, 3
          %v933 = vsel %vm399, %v931, %v932
          %v934 = vrot.slane %v927, 3
          %v935 = vsel %vm399, %v932, %v934
          %936 = vrot.lane.b32.xlu0 %v933, 126
          %v937 = vpop.permute.xlu0 %936
          %938 = vrot.lane.b32.xlu0 %v935, 126
          %v939 = vpop.permute.xlu0 %938
          %v942 = vadd.f32 %v921, %v937
          %v943 = vadd.f32 %v922, %v939
          %s944 = sld [smem:[#allocation3 + $0x48]]
          %v945 = vstv %s944
          %v946 = vmul.f32 %v945, %v304
          %v947 = vmul.f32 %v945, %v305
          %v948 = vmul.f32 %v945, %v306
          %v952 = vrot.slane %v946, 3
          %v953 = vrot.slane %v947, 3
          %v954 = vsel %vm399, %v952, %v953
          %v955 = vrot.slane %v948, 3
          %v956 = vsel %vm399, %v953, %v955
          %957 = vrot.lane.b32.xlu0 %v954, 126
          %v958 = vpop.permute.xlu0 %957
          %959 = vrot.lane.b32.xlu0 %v956, 126
          %v960 = vpop.permute.xlu0 %959
          %v963 = vadd.f32 %v942, %v958
          %v964 = vadd.f32 %v943, %v960
          %s965 = sld [smem:[#allocation3 + $0x1e]]
          %v966 = vstv %s965
          %v967 = vmul.f32 %v966, %v300
          %v968 = vmul.f32 %v966, %v301
          %v969 = vmul.f32 %v966, %v302
          %v973 = vrot.slane %v967, 4
          %v974 = vrot.slane %v968, 4
          %v975 = vsel %vm434, %v973, %v974
          %v976 = vrot.slane %v969, 4
          %v977 = vsel %vm434, %v974, %v976
          %978 = vrot.lane.b32.xlu0 %v975, 126
          %v979 = vpop.permute.xlu0 %978
          %980 = vrot.lane.b32.xlu0 %v977, 126
          %v981 = vpop.permute.xlu0 %980
          %v984 = vadd.f32 %v963, %v979
          %v985 = vadd.f32 %v964, %v981
          %s986 = sld [smem:[#allocation3 + $0x4f]]
          %v987 = vstv %s986
          %v988 = vmul.f32 %v987, %v304
          %v989 = vmul.f32 %v987, %v305
          %v990 = vmul.f32 %v987, %v306
          %v994 = vrot.slane %v988, 4
          %v995 = vrot.slane %v989, 4
          %v996 = vsel %vm434, %v994, %v995
          %v997 = vrot.slane %v990, 4
          %v998 = vsel %vm434, %v995, %v997
          %999 = vrot.lane.b32.xlu0 %v996, 126
          %v1000 = vpop.permute.xlu0 %999
          %1001 = vrot.lane.b32.xlu0 %v998, 126
          %v1002 = vpop.permute.xlu0 %1001
          %v1005 = vadd.f32 %v984, %v1000
          %v1006 = vadd.f32 %v985, %v1002
          %s1007 = sld [smem:[#allocation3 + $0x25]]
          %v1008 = vstv %s1007
          %v1009 = vmul.f32 %v1008, %v300
          %v1010 = vmul.f32 %v1008, %v301
          %v1011 = vmul.f32 %v1008, %v302
          %v1015 = vrot.slane %v1009, 5
          %v1016 = vrot.slane %v1010, 5
          %v1017 = vsel %vm469, %v1015, %v1016
          %v1018 = vrot.slane %v1011, 5
          %v1019 = vsel %vm469, %v1016, %v1018
          %1020 = vrot.lane.b32.xlu0 %v1017, 126
          %v1021 = vpop.permute.xlu0 %1020
          %1022 = vrot.lane.b32.xlu0 %v1019, 126
          %v1023 = vpop.permute.xlu0 %1022
          %v1026 = vadd.f32 %v1005, %v1021
          %v1027 = vadd.f32 %v1006, %v1023
          %s1028 = sld [smem:[#allocation3 + $0x56]]
          %v1029 = vstv %s1028
          %v1030 = vmul.f32 %v1029, %v304
          %v1031 = vmul.f32 %v1029, %v305
          %v1032 = vmul.f32 %v1029, %v306
          %v1036 = vrot.slane %v1030, 5
          %v1037 = vrot.slane %v1031, 5
          %v1038 = vsel %vm469, %v1036, %v1037
          %v1039 = vrot.slane %v1032, 5
          %v1040 = vsel %vm469, %v1037, %v1039
          %1041 = vrot.lane.b32.xlu0 %v1038, 126
          %v1042 = vpop.permute.xlu0 %1041
          %1043 = vrot.lane.b32.xlu0 %v1040, 126
          %v1044 = vpop.permute.xlu0 %1043
          %v1047 = vadd.f32 %v1026, %v1042
          %v1048 = vadd.f32 %v1027, %v1044
          %s1049 = sld [smem:[#allocation3 + $0x2c]]
          %v1050 = vstv %s1049
          %v1051 = vmul.f32 %v1050, %v300
          %v1052 = vmul.f32 %v1050, %v301
          %v1053 = vmul.f32 %v1050, %v302
          %v1057 = vrot.slane %v1051, 6
          %v1058 = vrot.slane %v1052, 6
          %v1059 = vsel %vm504, %v1057, %v1058
          %v1060 = vrot.slane %v1053, 6
          %v1061 = vsel %vm504, %v1058, %v1060
          %1062 = vrot.lane.b32.xlu0 %v1059, 126
          %v1063 = vpop.permute.xlu0 %1062
          %1064 = vrot.lane.b32.xlu0 %v1061, 126
          %v1065 = vpop.permute.xlu0 %1064
          %v1068 = vadd.f32 %v1047, %v1063
          %v1069 = vadd.f32 %v1048, %v1065
          %s1070 = sld [smem:[#allocation3 + $0x5d]]
          %v1071 = vstv %s1070
          %v1072 = vmul.f32 %v1071, %v304
          %v1073 = vmul.f32 %v1071, %v305
          %v1074 = vmul.f32 %v1071, %v306
          %v1078 = vrot.slane %v1072, 6
          %v1079 = vrot.slane %v1073, 6
          %v1080 = vsel %vm504, %v1078, %v1079
          %v1081 = vrot.slane %v1074, 6
          %v1082 = vsel %vm504, %v1079, %v1081
          %1083 = vrot.lane.b32.xlu0 %v1080, 126
          %v1084 = vpop.permute.xlu0 %1083
          %1085 = vrot.lane.b32.xlu0 %v1082, 126
          %v1086 = vpop.permute.xlu0 %1085
          %v1089 = vadd.f32 %v1068, %v1084
          %v1090 = vadd.f32 %v1069, %v1086
          %s1091 = sld [smem:[#allocation3 + $0x3]]
          %v1092 = vstv %s1091
          %v1093 = vmul.f32 %v1092, %v300
          %v1094 = vmul.f32 %v1092, %v301
          %1097 = vrot.lane.b32.xlu0 %v1093, 125
          %v1098 = vpop.permute.xlu0 %1097
          %1099 = vrot.lane.b32.xlu0 %v1094, 125
          %v1100 = vpop.permute.xlu0 %1099
          %v1103 = vadd.f32 %v1089, %v1098
          %v1104 = vadd.f32 %v1090, %v1100
          %s1105 = sld [smem:[#allocation3 + $0x34]]
          %v1106 = vstv %s1105
          %v1107 = vmul.f32 %v1106, %v304
          %v1108 = vmul.f32 %v1106, %v305
          %1111 = vrot.lane.b32.xlu0 %v1107, 125
          %v1112 = vpop.permute.xlu0 %1111
          %1113 = vrot.lane.b32.xlu0 %v1108, 125
          %v1114 = vpop.permute.xlu0 %1113
          %v1117 = vadd.f32 %v1103, %v1112
          %v1118 = vadd.f32 %v1104, %v1114
          %s1119 = sld [smem:[#allocation3 + $0xa]]
          %v1120 = vstv %s1119
          %v1121 = vmul.f32 %v1120, %v300
          %v1122 = vmul.f32 %v1120, %v301
          %v1123 = vmul.f32 %v1120, %v302
          %v1127 = vrot.slane %v1121, 1
          %v1128 = vrot.slane %v1122, 1
          %v1129 = vsel %vm329, %v1127, %v1128
          %v1130 = vrot.slane %v1123, 1
          %v1131 = vsel %vm329, %v1128, %v1130
          %1132 = vrot.lane.b32.xlu0 %v1129, 125
          %v1133 = vpop.permute.xlu0 %1132
          %1134 = vrot.lane.b32.xlu0 %v1131, 125
          %v1135 = vpop.permute.xlu0 %1134
          %v1138 = vadd.f32 %v1117, %v1133
          %v1139 = vadd.f32 %v1118, %v1135
          %s1140 = sld [smem:[#allocation3 + $0x3b]]
          %v1141 = vstv %s1140
          %v1142 = vmul.f32 %v1141, %v304
          %v1143 = vmul.f32 %v1141, %v305
          %v1144 = vmul.f32 %v1141, %v306
          %v1148 = vrot.slane %v1142, 1
          %v1149 = vrot.slane %v1143, 1
          %v1150 = vsel %vm329, %v1148, %v1149
          %v1151 = vrot.slane %v1144, 1
          %v1152 = vsel %vm329, %v1149, %v1151
          %1153 = vrot.lane.b32.xlu0 %v1150, 125
          %v1154 = vpop.permute.xlu0 %1153
          %1155 = vrot.lane.b32.xlu0 %v1152, 125
          %v1156 = vpop.permute.xlu0 %1155
          %v1159 = vadd.f32 %v1138, %v1154
          %v1160 = vadd.f32 %v1139, %v1156
          %s1161 = sld [smem:[#allocation3 + $0x11]]
          %v1162 = vstv %s1161
          %v1163 = vmul.f32 %v1162, %v300
          %v1164 = vmul.f32 %v1162, %v301
          %v1165 = vmul.f32 %v1162, %v302
          %v1169 = vrot.slane %v1163, 2
          %v1170 = vrot.slane %v1164, 2
          %v1171 = vsel %vm364, %v1169, %v1170
          %v1172 = vrot.slane %v1165, 2
          %v1173 = vsel %vm364, %v1170, %v1172
          %1174 = vrot.lane.b32.xlu0 %v1171, 125
          %v1175 = vpop.permute.xlu0 %1174
          %1176 = vrot.lane.b32.xlu0 %v1173, 125
          %v1177 = vpop.permute.xlu0 %1176
          %v1180 = vadd.f32 %v1159, %v1175
          %v1181 = vadd.f32 %v1160, %v1177
          %s1182 = sld [smem:[#allocation3 + $0x42]]
          %v1183 = vstv %s1182
          %v1184 = vmul.f32 %v1183, %v304
          %v1185 = vmul.f32 %v1183, %v305
          %v1186 = vmul.f32 %v1183, %v306
          %v1190 = vrot.slane %v1184, 2
          %v1191 = vrot.slane %v1185, 2
          %v1192 = vsel %vm364, %v1190, %v1191
          %v1193 = vrot.slane %v1186, 2
          %v1194 = vsel %vm364, %v1191, %v1193
          %1195 = vrot.lane.b32.xlu0 %v1192, 125
          %v1196 = vpop.permute.xlu0 %1195
          %1197 = vrot.lane.b32.xlu0 %v1194, 125
          %v1198 = vpop.permute.xlu0 %1197
          %v1201 = vadd.f32 %v1180, %v1196
          %v1202 = vadd.f32 %v1181, %v1198
          %s1203 = sld [smem:[#allocation3 + $0x18]]
          %v1204 = vstv %s1203
          %v1205 = vmul.f32 %v1204, %v300
          %v1206 = vmul.f32 %v1204, %v301
          %v1207 = vmul.f32 %v1204, %v302
          %v1211 = vrot.slane %v1205, 3
          %v1212 = vrot.slane %v1206, 3
          %v1213 = vsel %vm399, %v1211, %v1212
          %v1214 = vrot.slane %v1207, 3
          %v1215 = vsel %vm399, %v1212, %v1214
          %1216 = vrot.lane.b32.xlu0 %v1213, 125
          %v1217 = vpop.permute.xlu0 %1216
          %1218 = vrot.lane.b32.xlu0 %v1215, 125
          %v1219 = vpop.permute.xlu0 %1218
          %v1222 = vadd.f32 %v1201, %v1217
          %v1223 = vadd.f32 %v1202, %v1219
          %s1224 = sld [smem:[#allocation3 + $0x49]]
          %v1225 = vstv %s1224
          %v1226 = vmul.f32 %v1225, %v304
          %v1227 = vmul.f32 %v1225, %v305
          %v1228 = vmul.f32 %v1225, %v306
          %v1232 = vrot.slane %v1226, 3
          %v1233 = vrot.slane %v1227, 3
          %v1234 = vsel %vm399, %v1232, %v1233
          %v1235 = vrot.slane %v1228, 3
          %v1236 = vsel %vm399, %v1233, %v1235
          %1237 = vrot.lane.b32.xlu0 %v1234, 125
          %v1238 = vpop.permute.xlu0 %1237
          %1239 = vrot.lane.b32.xlu0 %v1236, 125
          %v1240 = vpop.permute.xlu0 %1239
          %v1243 = vadd.f32 %v1222, %v1238
          %v1244 = vadd.f32 %v1223, %v1240
          %s1245 = sld [smem:[#allocation3 + $0x1f]]
          %v1246 = vstv %s1245
          %v1247 = vmul.f32 %v1246, %v300
          %v1248 = vmul.f32 %v1246, %v301
          %v1249 = vmul.f32 %v1246, %v302
          %v1253 = vrot.slane %v1247, 4
          %v1254 = vrot.slane %v1248, 4
          %v1255 = vsel %vm434, %v1253, %v1254
          %v1256 = vrot.slane %v1249, 4
          %v1257 = vsel %vm434, %v1254, %v1256
          %1258 = vrot.lane.b32.xlu0 %v1255, 125
          %v1259 = vpop.permute.xlu0 %1258
          %1260 = vrot.lane.b32.xlu0 %v1257, 125
          %v1261 = vpop.permute.xlu0 %1260
          %v1264 = vadd.f32 %v1243, %v1259
          %v1265 = vadd.f32 %v1244, %v1261
          %s1266 = sld [smem:[#allocation3 + $0x50]]
          %v1267 = vstv %s1266
          %v1268 = vmul.f32 %v1267, %v304
          %v1269 = vmul.f32 %v1267, %v305
          %v1270 = vmul.f32 %v1267, %v306
          %v1274 = vrot.slane %v1268, 4
          %v1275 = vrot.slane %v1269, 4
          %v1276 = vsel %vm434, %v1274, %v1275
          %v1277 = vrot.slane %v1270, 4
          %v1278 = vsel %vm434, %v1275, %v1277
          %1279 = vrot.lane.b32.xlu0 %v1276, 125
          %v1280 = vpop.permute.xlu0 %1279
          %1281 = vrot.lane.b32.xlu0 %v1278, 125
          %v1282 = vpop.permute.xlu0 %1281
          %v1285 = vadd.f32 %v1264, %v1280
          %v1286 = vadd.f32 %v1265, %v1282
          %s1287 = sld [smem:[#allocation3 + $0x26]]
          %v1288 = vstv %s1287
          %v1289 = vmul.f32 %v1288, %v300
          %v1290 = vmul.f32 %v1288, %v301
          %v1291 = vmul.f32 %v1288, %v302
          %v1295 = vrot.slane %v1289, 5
          %v1296 = vrot.slane %v1290, 5
          %v1297 = vsel %vm469, %v1295, %v1296
          %v1298 = vrot.slane %v1291, 5
          %v1299 = vsel %vm469, %v1296, %v1298
          %1300 = vrot.lane.b32.xlu0 %v1297, 125
          %v1301 = vpop.permute.xlu0 %1300
          %1302 = vrot.lane.b32.xlu0 %v1299, 125
          %v1303 = vpop.permute.xlu0 %1302
          %v1306 = vadd.f32 %v1285, %v1301
          %v1307 = vadd.f32 %v1286, %v1303
          %s1308 = sld [smem:[#allocation3 + $0x57]]
          %v1309 = vstv %s1308
          %v1310 = vmul.f32 %v1309, %v304
          %v1311 = vmul.f32 %v1309, %v305
          %v1312 = vmul.f32 %v1309, %v306
          %v1316 = vrot.slane %v1310, 5
          %v1317 = vrot.slane %v1311, 5
          %v1318 = vsel %vm469, %v1316, %v1317
          %v1319 = vrot.slane %v1312, 5
          %v1320 = vsel %vm469, %v1317, %v1319
          %1321 = vrot.lane.b32.xlu0 %v1318, 125
          %v1322 = vpop.permute.xlu0 %1321
          %1323 = vrot.lane.b32.xlu0 %v1320, 125
          %v1324 = vpop.permute.xlu0 %1323
          %v1327 = vadd.f32 %v1306, %v1322
          %v1328 = vadd.f32 %v1307, %v1324
          %s1329 = sld [smem:[#allocation3 + $0x2d]]
          %v1330 = vstv %s1329
          %v1331 = vmul.f32 %v1330, %v300
          %v1332 = vmul.f32 %v1330, %v301
          %v1333 = vmul.f32 %v1330, %v302
          %v1337 = vrot.slane %v1331, 6
          %v1338 = vrot.slane %v1332, 6
          %v1339 = vsel %vm504, %v1337, %v1338
          %v1340 = vrot.slane %v1333, 6
          %v1341 = vsel %vm504, %v1338, %v1340
          %1342 = vrot.lane.b32.xlu0 %v1339, 125
          %v1343 = vpop.permute.xlu0 %1342
          %1344 = vrot.lane.b32.xlu0 %v1341, 125
          %v1345 = vpop.permute.xlu0 %1344
          %v1348 = vadd.f32 %v1327, %v1343
          %v1349 = vadd.f32 %v1328, %v1345
          %s1350 = sld [smem:[#allocation3 + $0x5e]]
          %v1351 = vstv %s1350
          %v1352 = vmul.f32 %v1351, %v304
          %v1353 = vmul.f32 %v1351, %v305
          %v1354 = vmul.f32 %v1351, %v306
          %v1358 = vrot.slane %v1352, 6
          %v1359 = vrot.slane %v1353, 6
          %v1360 = vsel %vm504, %v1358, %v1359
          %v1361 = vrot.slane %v1354, 6
          %v1362 = vsel %vm504, %v1359, %v1361
          %1363 = vrot.lane.b32.xlu0 %v1360, 125
          %v1364 = vpop.permute.xlu0 %1363
          %1365 = vrot.lane.b32.xlu0 %v1362, 125
          %v1366 = vpop.permute.xlu0 %1365
          %v1369 = vadd.f32 %v1348, %v1364
          %v1370 = vadd.f32 %v1349, %v1366
          %s1371 = sld [smem:[#allocation3 + $0x4]]
          %v1372 = vstv %s1371
          %v1373 = vmul.f32 %v1372, %v300
          %v1374 = vmul.f32 %v1372, %v301
          %1377 = vrot.lane.b32.xlu0 %v1373, 124
          %v1378 = vpop.permute.xlu0 %1377
          %1379 = vrot.lane.b32.xlu0 %v1374, 124
          %v1380 = vpop.permute.xlu0 %1379
          %v1383 = vadd.f32 %v1369, %v1378
          %v1384 = vadd.f32 %v1370, %v1380
          %s1385 = sld [smem:[#allocation3 + $0x35]]
          %v1386 = vstv %s1385
          %v1387 = vmul.f32 %v1386, %v304
          %v1388 = vmul.f32 %v1386, %v305
          %1391 = vrot.lane.b32.xlu0 %v1387, 124
          %v1392 = vpop.permute.xlu0 %1391
          %1393 = vrot.lane.b32.xlu0 %v1388, 124
          %v1394 = vpop.permute.xlu0 %1393
          %v1397 = vadd.f32 %v1383, %v1392
          %v1398 = vadd.f32 %v1384, %v1394
          %s1399 = sld [smem:[#allocation3 + $0xb]]
          %v1400 = vstv %s1399
          %v1401 = vmul.f32 %v1400, %v300
          %v1402 = vmul.f32 %v1400, %v301
          %v1403 = vmul.f32 %v1400, %v302
          %v1407 = vrot.slane %v1401, 1
          %v1408 = vrot.slane %v1402, 1
          %v1409 = vsel %vm329, %v1407, %v1408
          %v1410 = vrot.slane %v1403, 1
          %v1411 = vsel %vm329, %v1408, %v1410
          %1412 = vrot.lane.b32.xlu0 %v1409, 124
          %v1413 = vpop.permute.xlu0 %1412
          %1414 = vrot.lane.b32.xlu0 %v1411, 124
          %v1415 = vpop.permute.xlu0 %1414
          %v1418 = vadd.f32 %v1397, %v1413
          %v1419 = vadd.f32 %v1398, %v1415
          %s1420 = sld [smem:[#allocation3 + $0x3c]]
          %v1421 = vstv %s1420
          %v1422 = vmul.f32 %v1421, %v304
          %v1423 = vmul.f32 %v1421, %v305
          %v1424 = vmul.f32 %v1421, %v306
          %v1428 = vrot.slane %v1422, 1
          %v1429 = vrot.slane %v1423, 1
          %v1430 = vsel %vm329, %v1428, %v1429
          %v1431 = vrot.slane %v1424, 1
          %v1432 = vsel %vm329, %v1429, %v1431
          %1433 = vrot.lane.b32.xlu0 %v1430, 124
          %v1434 = vpop.permute.xlu0 %1433
          %1435 = vrot.lane.b32.xlu0 %v1432, 124
          %v1436 = vpop.permute.xlu0 %1435
          %v1439 = vadd.f32 %v1418, %v1434
          %v1440 = vadd.f32 %v1419, %v1436
          %s1441 = sld [smem:[#allocation3 + $0x12]]
          %v1442 = vstv %s1441
          %v1443 = vmul.f32 %v1442, %v300
          %v1444 = vmul.f32 %v1442, %v301
          %v1445 = vmul.f32 %v1442, %v302
          %v1449 = vrot.slane %v1443, 2
          %v1450 = vrot.slane %v1444, 2
          %v1451 = vsel %vm364, %v1449, %v1450
          %v1452 = vrot.slane %v1445, 2
          %v1453 = vsel %vm364, %v1450, %v1452
          %1454 = vrot.lane.b32.xlu0 %v1451, 124
          %v1455 = vpop.permute.xlu0 %1454
          %1456 = vrot.lane.b32.xlu0 %v1453, 124
          %v1457 = vpop.permute.xlu0 %1456
          %v1460 = vadd.f32 %v1439, %v1455
          %v1461 = vadd.f32 %v1440, %v1457
          %s1462 = sld [smem:[#allocation3 + $0x43]]
          %v1463 = vstv %s1462
          %v1464 = vmul.f32 %v1463, %v304
          %v1465 = vmul.f32 %v1463, %v305
          %v1466 = vmul.f32 %v1463, %v306
          %v1470 = vrot.slane %v1464, 2
          %v1471 = vrot.slane %v1465, 2
          %v1472 = vsel %vm364, %v1470, %v1471
          %v1473 = vrot.slane %v1466, 2
          %v1474 = vsel %vm364, %v1471, %v1473
          %1475 = vrot.lane.b32.xlu0 %v1472, 124
          %v1476 = vpop.permute.xlu0 %1475
          %1477 = vrot.lane.b32.xlu0 %v1474, 124
          %v1478 = vpop.permute.xlu0 %1477
          %v1481 = vadd.f32 %v1460, %v1476
          %v1482 = vadd.f32 %v1461, %v1478
          %s1483 = sld [smem:[#allocation3 + $0x19]]
          %v1484 = vstv %s1483
          %v1485 = vmul.f32 %v1484, %v300
          %v1486 = vmul.f32 %v1484, %v301
          %v1487 = vmul.f32 %v1484, %v302
          %v1491 = vrot.slane %v1485, 3
          %v1492 = vrot.slane %v1486, 3
          %v1493 = vsel %vm399, %v1491, %v1492
          %v1494 = vrot.slane %v1487, 3
          %v1495 = vsel %vm399, %v1492, %v1494
          %1496 = vrot.lane.b32.xlu0 %v1493, 124
          %v1497 = vpop.permute.xlu0 %1496
          %1498 = vrot.lane.b32.xlu0 %v1495, 124
          %v1499 = vpop.permute.xlu0 %1498
          %v1502 = vadd.f32 %v1481, %v1497
          %v1503 = vadd.f32 %v1482, %v1499
          %s1504 = sld [smem:[#allocation3 + $0x4a]]
          %v1505 = vstv %s1504
          %v1506 = vmul.f32 %v1505, %v304
          %v1507 = vmul.f32 %v1505, %v305
          %v1508 = vmul.f32 %v1505, %v306
          %v1512 = vrot.slane %v1506, 3
          %v1513 = vrot.slane %v1507, 3
          %v1514 = vsel %vm399, %v1512, %v1513
          %v1515 = vrot.slane %v1508, 3
          %v1516 = vsel %vm399, %v1513, %v1515
          %1517 = vrot.lane.b32.xlu0 %v1514, 124
          %v1518 = vpop.permute.xlu0 %1517
          %1519 = vrot.lane.b32.xlu0 %v1516, 124
          %v1520 = vpop.permute.xlu0 %1519
          %v1523 = vadd.f32 %v1502, %v1518
          %v1524 = vadd.f32 %v1503, %v1520
          %s1525 = sld [smem:[#allocation3 + $0x20]]
          %v1526 = vstv %s1525
          %v1527 = vmul.f32 %v1526, %v300
          %v1528 = vmul.f32 %v1526, %v301
          %v1529 = vmul.f32 %v1526, %v302
          %v1533 = vrot.slane %v1527, 4
          %v1534 = vrot.slane %v1528, 4
          %v1535 = vsel %vm434, %v1533, %v1534
          %v1536 = vrot.slane %v1529, 4
          %v1537 = vsel %vm434, %v1534, %v1536
          %1538 = vrot.lane.b32.xlu0 %v1535, 124
          %v1539 = vpop.permute.xlu0 %1538
          %1540 = vrot.lane.b32.xlu0 %v1537, 124
          %v1541 = vpop.permute.xlu0 %1540
          %v1544 = vadd.f32 %v1523, %v1539
          %v1545 = vadd.f32 %v1524, %v1541
          %s1546 = sld [smem:[#allocation3 + $0x51]]
          %v1547 = vstv %s1546
          %v1548 = vmul.f32 %v1547, %v304
          %v1549 = vmul.f32 %v1547, %v305
          %v1550 = vmul.f32 %v1547, %v306
          %v1554 = vrot.slane %v1548, 4
          %v1555 = vrot.slane %v1549, 4
          %v1556 = vsel %vm434, %v1554, %v1555
          %v1557 = vrot.slane %v1550, 4
          %v1558 = vsel %vm434, %v1555, %v1557
          %1559 = vrot.lane.b32.xlu0 %v1556, 124
          %v1560 = vpop.permute.xlu0 %1559
          %1561 = vrot.lane.b32.xlu0 %v1558, 124
          %v1562 = vpop.permute.xlu0 %1561
          %v1565 = vadd.f32 %v1544, %v1560
          %v1566 = vadd.f32 %v1545, %v1562
          %s1567 = sld [smem:[#allocation3 + $0x27]]
          %v1568 = vstv %s1567
          %v1569 = vmul.f32 %v1568, %v300
          %v1570 = vmul.f32 %v1568, %v301
          %v1571 = vmul.f32 %v1568, %v302
          %v1575 = vrot.slane %v1569, 5
          %v1576 = vrot.slane %v1570, 5
          %v1577 = vsel %vm469, %v1575, %v1576
          %v1578 = vrot.slane %v1571, 5
          %v1579 = vsel %vm469, %v1576, %v1578
          %1580 = vrot.lane.b32.xlu0 %v1577, 124
          %v1581 = vpop.permute.xlu0 %1580
          %1582 = vrot.lane.b32.xlu0 %v1579, 124
          %v1583 = vpop.permute.xlu0 %1582
          %v1586 = vadd.f32 %v1565, %v1581
          %v1587 = vadd.f32 %v1566, %v1583
          %s1588 = sld [smem:[#allocation3 + $0x58]]
          %v1589 = vstv %s1588
          %v1590 = vmul.f32 %v1589, %v304
          %v1591 = vmul.f32 %v1589, %v305
          %v1592 = vmul.f32 %v1589, %v306
          %v1596 = vrot.slane %v1590, 5
          %v1597 = vrot.slane %v1591, 5
          %v1598 = vsel %vm469, %v1596, %v1597
          %v1599 = vrot.slane %v1592, 5
          %v1600 = vsel %vm469, %v1597, %v1599
          %1601 = vrot.lane.b32.xlu0 %v1598, 124
          %v1602 = vpop.permute.xlu0 %1601
          %1603 = vrot.lane.b32.xlu0 %v1600, 124
          %v1604 = vpop.permute.xlu0 %1603
          %v1607 = vadd.f32 %v1586, %v1602
          %v1608 = vadd.f32 %v1587, %v1604
          %s1609 = sld [smem:[#allocation3 + $0x2e]]
          %v1610 = vstv %s1609
          %v1611 = vmul.f32 %v1610, %v300
          %v1612 = vmul.f32 %v1610, %v301
          %v1613 = vmul.f32 %v1610, %v302
          %v1617 = vrot.slane %v1611, 6
          %v1618 = vrot.slane %v1612, 6
          %v1619 = vsel %vm504, %v1617, %v1618
          %v1620 = vrot.slane %v1613, 6
          %v1621 = vsel %vm504, %v1618, %v1620
          %1622 = vrot.lane.b32.xlu0 %v1619, 124
          %v1623 = vpop.permute.xlu0 %1622
          %1624 = vrot.lane.b32.xlu0 %v1621, 124
          %v1625 = vpop.permute.xlu0 %1624
          %v1628 = vadd.f32 %v1607, %v1623
          %v1629 = vadd.f32 %v1608, %v1625
          %s1630 = sld [smem:[#allocation3 + $0x5f]]
          %v1631 = vstv %s1630
          %v1632 = vmul.f32 %v1631, %v304
          %v1633 = vmul.f32 %v1631, %v305
          %v1634 = vmul.f32 %v1631, %v306
          %v1638 = vrot.slane %v1632, 6
          %v1639 = vrot.slane %v1633, 6
          %v1640 = vsel %vm504, %v1638, %v1639
          %v1641 = vrot.slane %v1634, 6
          %v1642 = vsel %vm504, %v1639, %v1641
          %1643 = vrot.lane.b32.xlu0 %v1640, 124
          %v1644 = vpop.permute.xlu0 %1643
          %1645 = vrot.lane.b32.xlu0 %v1642, 124
          %v1646 = vpop.permute.xlu0 %1645
          %v1649 = vadd.f32 %v1628, %v1644
          %v1650 = vadd.f32 %v1629, %v1646
          %s1651 = sld [smem:[#allocation3 + $0x5]]
          %v1652 = vstv %s1651
          %v1653 = vmul.f32 %v1652, %v300
          %v1654 = vmul.f32 %v1652, %v301
          %1657 = vrot.lane.b32.xlu0 %v1653, 123
          %v1658 = vpop.permute.xlu0 %1657
          %1659 = vrot.lane.b32.xlu0 %v1654, 123
          %v1660 = vpop.permute.xlu0 %1659
          %v1663 = vadd.f32 %v1649, %v1658
          %v1664 = vadd.f32 %v1650, %v1660
          %s1665 = sld [smem:[#allocation3 + $0x36]]
          %v1666 = vstv %s1665
          %v1667 = vmul.f32 %v1666, %v304
          %v1668 = vmul.f32 %v1666, %v305
          %1671 = vrot.lane.b32.xlu0 %v1667, 123
          %v1672 = vpop.permute.xlu0 %1671
          %1673 = vrot.lane.b32.xlu0 %v1668, 123
          %v1674 = vpop.permute.xlu0 %1673
          %v1677 = vadd.f32 %v1663, %v1672
          %v1678 = vadd.f32 %v1664, %v1674
          %s1679 = sld [smem:[#allocation3 + $0xc]]
          %v1680 = vstv %s1679
          %v1681 = vmul.f32 %v1680, %v300
          %v1682 = vmul.f32 %v1680, %v301
          %v1683 = vmul.f32 %v1680, %v302
          %v1687 = vrot.slane %v1681, 1
          %v1688 = vrot.slane %v1682, 1
          %v1689 = vsel %vm329, %v1687, %v1688
          %v1690 = vrot.slane %v1683, 1
          %v1691 = vsel %vm329, %v1688, %v1690
          %1692 = vrot.lane.b32.xlu0 %v1689, 123
          %v1693 = vpop.permute.xlu0 %1692
          %1694 = vrot.lane.b32.xlu0 %v1691, 123
          %v1695 = vpop.permute.xlu0 %1694
          %v1698 = vadd.f32 %v1677, %v1693
          %v1699 = vadd.f32 %v1678, %v1695
          %s1700 = sld [smem:[#allocation3 + $0x3d]]
          %v1701 = vstv %s1700
          %v1702 = vmul.f32 %v1701, %v304
          %v1703 = vmul.f32 %v1701, %v305
          %v1704 = vmul.f32 %v1701, %v306
          %v1708 = vrot.slane %v1702, 1
          %v1709 = vrot.slane %v1703, 1
          %v1710 = vsel %vm329, %v1708, %v1709
          %v1711 = vrot.slane %v1704, 1
          %v1712 = vsel %vm329, %v1709, %v1711
          %1713 = vrot.lane.b32.xlu0 %v1710, 123
          %v1714 = vpop.permute.xlu0 %1713
          %1715 = vrot.lane.b32.xlu0 %v1712, 123
          %v1716 = vpop.permute.xlu0 %1715
          %v1719 = vadd.f32 %v1698, %v1714
          %v1720 = vadd.f32 %v1699, %v1716
          %s1721 = sld [smem:[#allocation3 + $0x13]]
          %v1722 = vstv %s1721
          %v1723 = vmul.f32 %v1722, %v300
          %v1724 = vmul.f32 %v1722, %v301
          %v1725 = vmul.f32 %v1722, %v302
          %v1729 = vrot.slane %v1723, 2
          %v1730 = vrot.slane %v1724, 2
          %v1731 = vsel %vm364, %v1729, %v1730
          %v1732 = vrot.slane %v1725, 2
          %v1733 = vsel %vm364, %v1730, %v1732
          %1734 = vrot.lane.b32.xlu0 %v1731, 123
          %v1735 = vpop.permute.xlu0 %1734
          %1736 = vrot.lane.b32.xlu0 %v1733, 123
          %v1737 = vpop.permute.xlu0 %1736
          %v1740 = vadd.f32 %v1719, %v1735
          %v1741 = vadd.f32 %v1720, %v1737
          %s1742 = sld [smem:[#allocation3 + $0x44]]
          %v1743 = vstv %s1742
          %v1744 = vmul.f32 %v1743, %v304
          %v1745 = vmul.f32 %v1743, %v305
          %v1746 = vmul.f32 %v1743, %v306
          %v1750 = vrot.slane %v1744, 2
          %v1751 = vrot.slane %v1745, 2
          %v1752 = vsel %vm364, %v1750, %v1751
          %v1753 = vrot.slane %v1746, 2
          %v1754 = vsel %vm364, %v1751, %v1753
          %1755 = vrot.lane.b32.xlu0 %v1752, 123
          %v1756 = vpop.permute.xlu0 %1755
          %1757 = vrot.lane.b32.xlu0 %v1754, 123
          %v1758 = vpop.permute.xlu0 %1757
          %v1761 = vadd.f32 %v1740, %v1756
          %v1762 = vadd.f32 %v1741, %v1758
          %s1763 = sld [smem:[#allocation3 + $0x1a]]
          %v1764 = vstv %s1763
          %v1765 = vmul.f32 %v1764, %v300
          %v1766 = vmul.f32 %v1764, %v301
          %v1767 = vmul.f32 %v1764, %v302
          %v1771 = vrot.slane %v1765, 3
          %v1772 = vrot.slane %v1766, 3
          %v1773 = vsel %vm399, %v1771, %v1772
          %v1774 = vrot.slane %v1767, 3
          %v1775 = vsel %vm399, %v1772, %v1774
          %1776 = vrot.lane.b32.xlu0 %v1773, 123
          %v1777 = vpop.permute.xlu0 %1776
          %1778 = vrot.lane.b32.xlu0 %v1775, 123
          %v1779 = vpop.permute.xlu0 %1778
          %v1782 = vadd.f32 %v1761, %v1777
          %v1783 = vadd.f32 %v1762, %v1779
          %s1784 = sld [smem:[#allocation3 + $0x4b]]
          %v1785 = vstv %s1784
          %v1786 = vmul.f32 %v1785, %v304
          %v1787 = vmul.f32 %v1785, %v305
          %v1788 = vmul.f32 %v1785, %v306
          %v1792 = vrot.slane %v1786, 3
          %v1793 = vrot.slane %v1787, 3
          %v1794 = vsel %vm399, %v1792, %v1793
          %v1795 = vrot.slane %v1788, 3
          %v1796 = vsel %vm399, %v1793, %v1795
          %1797 = vrot.lane.b32.xlu0 %v1794, 123
          %v1798 = vpop.permute.xlu0 %1797
          %1799 = vrot.lane.b32.xlu0 %v1796, 123
          %v1800 = vpop.permute.xlu0 %1799
          %v1803 = vadd.f32 %v1782, %v1798
          %v1804 = vadd.f32 %v1783, %v1800
          %s1805 = sld [smem:[#allocation3 + $0x21]]
          %v1806 = vstv %s1805
          %v1807 = vmul.f32 %v1806, %v300
          %v1808 = vmul.f32 %v1806, %v301
          %v1809 = vmul.f32 %v1806, %v302
          %v1813 = vrot.slane %v1807, 4
          %v1814 = vrot.slane %v1808, 4
          %v1815 = vsel %vm434, %v1813, %v1814
          %v1816 = vrot.slane %v1809, 4
          %v1817 = vsel %vm434, %v1814, %v1816
          %1818 = vrot.lane.b32.xlu0 %v1815, 123
          %v1819 = vpop.permute.xlu0 %1818
          %1820 = vrot.lane.b32.xlu0 %v1817, 123
          %v1821 = vpop.permute.xlu0 %1820
          %v1824 = vadd.f32 %v1803, %v1819
          %v1825 = vadd.f32 %v1804, %v1821
          %s1826 = sld [smem:[#allocation3 + $0x52]]
          %v1827 = vstv %s1826
          %v1828 = vmul.f32 %v1827, %v304
          %v1829 = vmul.f32 %v1827, %v305
          %v1830 = vmul.f32 %v1827, %v306
          %v1834 = vrot.slane %v1828, 4
          %v1835 = vrot.slane %v1829, 4
          %v1836 = vsel %vm434, %v1834, %v1835
          %v1837 = vrot.slane %v1830, 4
          %v1838 = vsel %vm434, %v1835, %v1837
          %1839 = vrot.lane.b32.xlu0 %v1836, 123
          %v1840 = vpop.permute.xlu0 %1839
          %1841 = vrot.lane.b32.xlu0 %v1838, 123
          %v1842 = vpop.permute.xlu0 %1841
          %v1845 = vadd.f32 %v1824, %v1840
          %v1846 = vadd.f32 %v1825, %v1842
          %s1847 = sld [smem:[#allocation3 + $0x28]]
          %v1848 = vstv %s1847
          %v1849 = vmul.f32 %v1848, %v300
          %v1850 = vmul.f32 %v1848, %v301
          %v1851 = vmul.f32 %v1848, %v302
          %v1855 = vrot.slane %v1849, 5
          %v1856 = vrot.slane %v1850, 5
          %v1857 = vsel %vm469, %v1855, %v1856
          %v1858 = vrot.slane %v1851, 5
          %v1859 = vsel %vm469, %v1856, %v1858
          %1860 = vrot.lane.b32.xlu0 %v1857, 123
          %v1861 = vpop.permute.xlu0 %1860
          %1862 = vrot.lane.b32.xlu0 %v1859, 123
          %v1863 = vpop.permute.xlu0 %1862
          %v1866 = vadd.f32 %v1845, %v1861
          %v1867 = vadd.f32 %v1846, %v1863
          %s1868 = sld [smem:[#allocation3 + $0x59]]
          %v1869 = vstv %s1868
          %v1870 = vmul.f32 %v1869, %v304
          %v1871 = vmul.f32 %v1869, %v305
          %v1872 = vmul.f32 %v1869, %v306
          %v1876 = vrot.slane %v1870, 5
          %v1877 = vrot.slane %v1871, 5
          %v1878 = vsel %vm469, %v1876, %v1877
          %v1879 = vrot.slane %v1872, 5
          %v1880 = vsel %vm469, %v1877, %v1879
          %1881 = vrot.lane.b32.xlu0 %v1878, 123
          %v1882 = vpop.permute.xlu0 %1881
          %1883 = vrot.lane.b32.xlu0 %v1880, 123
          %v1884 = vpop.permute.xlu0 %1883
          %v1887 = vadd.f32 %v1866, %v1882
          %v1888 = vadd.f32 %v1867, %v1884
          %s1889 = sld [smem:[#allocation3 + $0x2f]]
          %v1890 = vstv %s1889
          %v1891 = vmul.f32 %v1890, %v300
          %v1892 = vmul.f32 %v1890, %v301
          %v1893 = vmul.f32 %v1890, %v302
          %v1897 = vrot.slane %v1891, 6
          %v1898 = vrot.slane %v1892, 6
          %v1899 = vsel %vm504, %v1897, %v1898
          %v1900 = vrot.slane %v1893, 6
          %v1901 = vsel %vm504, %v1898, %v1900
          %1902 = vrot.lane.b32.xlu0 %v1899, 123
          %v1903 = vpop.permute.xlu0 %1902
          %1904 = vrot.lane.b32.xlu0 %v1901, 123
          %v1905 = vpop.permute.xlu0 %1904
          %v1908 = vadd.f32 %v1887, %v1903
          %v1909 = vadd.f32 %v1888, %v1905
          %s1910 = sld [smem:[#allocation3 + $0x60]]
          %v1911 = vstv %s1910
          %v1912 = vmul.f32 %v1911, %v304
          %v1913 = vmul.f32 %v1911, %v305
          %v1914 = vmul.f32 %v1911, %v306
          %v1918 = vrot.slane %v1912, 6
          %v1919 = vrot.slane %v1913, 6
          %v1920 = vsel %vm504, %v1918, %v1919
          %v1921 = vrot.slane %v1914, 6
          %v1922 = vsel %vm504, %v1919, %v1921
          %1923 = vrot.lane.b32.xlu0 %v1920, 123
          %v1924 = vpop.permute.xlu0 %1923
          %1925 = vrot.lane.b32.xlu0 %v1922, 123
          %v1926 = vpop.permute.xlu0 %1925
          %v1929 = vadd.f32 %v1908, %v1924
          %v1930 = vadd.f32 %v1909, %v1926
          %s1931 = sld [smem:[#allocation3 + $0x6]]
          %v1932 = vstv %s1931
          %v1933 = vmul.f32 %v1932, %v300
          %v1934 = vmul.f32 %v1932, %v301
          %1937 = vrot.lane.b32.xlu0 %v1933, 122
          %v1938 = vpop.permute.xlu0 %1937
          %1939 = vrot.lane.b32.xlu0 %v1934, 122
          %v1940 = vpop.permute.xlu0 %1939
          %v1943 = vadd.f32 %v1929, %v1938
          %v1944 = vadd.f32 %v1930, %v1940
          %s1945 = sld [smem:[#allocation3 + $0x37]]
          %v1946 = vstv %s1945
          %v1947 = vmul.f32 %v1946, %v304
          %v1948 = vmul.f32 %v1946, %v305
          %1951 = vrot.lane.b32.xlu0 %v1947, 122
          %v1952 = vpop.permute.xlu0 %1951
          %1953 = vrot.lane.b32.xlu0 %v1948, 122
          %v1954 = vpop.permute.xlu0 %1953
          %v1957 = vadd.f32 %v1943, %v1952
          %v1958 = vadd.f32 %v1944, %v1954
          %s1959 = sld [smem:[#allocation3 + $0xd]]
          %v1960 = vstv %s1959
          %v1961 = vmul.f32 %v1960, %v300
          %v1962 = vmul.f32 %v1960, %v301
          %v1963 = vmul.f32 %v1960, %v302
          %v1967 = vrot.slane %v1961, 1
          %v1968 = vrot.slane %v1962, 1
          %v1969 = vsel %vm329, %v1967, %v1968
          %v1970 = vrot.slane %v1963, 1
          %v1971 = vsel %vm329, %v1968, %v1970
          %1972 = vrot.lane.b32.xlu0 %v1969, 122
          %v1973 = vpop.permute.xlu0 %1972
          %1974 = vrot.lane.b32.xlu0 %v1971, 122
          %v1975 = vpop.permute.xlu0 %1974
          %v1978 = vadd.f32 %v1957, %v1973
          %v1979 = vadd.f32 %v1958, %v1975
          %s1980 = sld [smem:[#allocation3 + $0x3e]]
          %v1981 = vstv %s1980
          %v1982 = vmul.f32 %v1981, %v304
          %v1983 = vmul.f32 %v1981, %v305
          %v1984 = vmul.f32 %v1981, %v306
          %v1988 = vrot.slane %v1982, 1
          %v1989 = vrot.slane %v1983, 1
          %v1990 = vsel %vm329, %v1988, %v1989
          %v1991 = vrot.slane %v1984, 1
          %v1992 = vsel %vm329, %v1989, %v1991
          %1993 = vrot.lane.b32.xlu0 %v1990, 122
          %v1994 = vpop.permute.xlu0 %1993
          %1995 = vrot.lane.b32.xlu0 %v1992, 122
          %v1996 = vpop.permute.xlu0 %1995
          %v1999 = vadd.f32 %v1978, %v1994
          %v2000 = vadd.f32 %v1979, %v1996
          %s2001 = sld [smem:[#allocation3 + $0x14]]
          %v2002 = vstv %s2001
          %v2003 = vmul.f32 %v2002, %v300
          %v2004 = vmul.f32 %v2002, %v301
          %v2005 = vmul.f32 %v2002, %v302
          %v2009 = vrot.slane %v2003, 2
          %v2010 = vrot.slane %v2004, 2
          %v2011 = vsel %vm364, %v2009, %v2010
          %v2012 = vrot.slane %v2005, 2
          %v2013 = vsel %vm364, %v2010, %v2012
          %2014 = vrot.lane.b32.xlu0 %v2011, 122
          %v2015 = vpop.permute.xlu0 %2014
          %2016 = vrot.lane.b32.xlu0 %v2013, 122
          %v2017 = vpop.permute.xlu0 %2016
          %v2020 = vadd.f32 %v1999, %v2015
          %v2021 = vadd.f32 %v2000, %v2017
          %s2022 = sld [smem:[#allocation3 + $0x45]]
          %v2023 = vstv %s2022
          %v2024 = vmul.f32 %v2023, %v304
          %v2025 = vmul.f32 %v2023, %v305
          %v2026 = vmul.f32 %v2023, %v306
          %v2030 = vrot.slane %v2024, 2
          %v2031 = vrot.slane %v2025, 2
          %v2032 = vsel %vm364, %v2030, %v2031
          %v2033 = vrot.slane %v2026, 2
          %v2034 = vsel %vm364, %v2031, %v2033
          %2035 = vrot.lane.b32.xlu0 %v2032, 122
          %v2036 = vpop.permute.xlu0 %2035
          %2037 = vrot.lane.b32.xlu0 %v2034, 122
          %v2038 = vpop.permute.xlu0 %2037
          %v2041 = vadd.f32 %v2020, %v2036
          %v2042 = vadd.f32 %v2021, %v2038
          %s2043 = sld [smem:[#allocation3 + $0x1b]]
          %v2044 = vstv %s2043
          %v2045 = vmul.f32 %v2044, %v300
          %v2046 = vmul.f32 %v2044, %v301
          %v2047 = vmul.f32 %v2044, %v302
          %v2051 = vrot.slane %v2045, 3
          %v2052 = vrot.slane %v2046, 3
          %v2053 = vsel %vm399, %v2051, %v2052
          %v2054 = vrot.slane %v2047, 3
          %v2055 = vsel %vm399, %v2052, %v2054
          %2056 = vrot.lane.b32.xlu0 %v2053, 122
          %v2057 = vpop.permute.xlu0 %2056
          %2058 = vrot.lane.b32.xlu0 %v2055, 122
          %v2059 = vpop.permute.xlu0 %2058
          %v2062 = vadd.f32 %v2041, %v2057
          %v2063 = vadd.f32 %v2042, %v2059
          %s2064 = sld [smem:[#allocation3 + $0x4c]]
          %v2065 = vstv %s2064
          %v2066 = vmul.f32 %v2065, %v304
          %v2067 = vmul.f32 %v2065, %v305
          %v2068 = vmul.f32 %v2065, %v306
          %v2072 = vrot.slane %v2066, 3
          %v2073 = vrot.slane %v2067, 3
          %v2074 = vsel %vm399, %v2072, %v2073
          %v2075 = vrot.slane %v2068, 3
          %v2076 = vsel %vm399, %v2073, %v2075
          %2077 = vrot.lane.b32.xlu0 %v2074, 122
          %v2078 = vpop.permute.xlu0 %2077
          %2079 = vrot.lane.b32.xlu0 %v2076, 122
          %v2080 = vpop.permute.xlu0 %2079
          %v2083 = vadd.f32 %v2062, %v2078
          %v2084 = vadd.f32 %v2063, %v2080
          %s2085 = sld [smem:[#allocation3 + $0x22]]
          %v2086 = vstv %s2085
          %v2087 = vmul.f32 %v2086, %v300
          %v2088 = vmul.f32 %v2086, %v301
          %v2089 = vmul.f32 %v2086, %v302
          %v2093 = vrot.slane %v2087, 4
          %v2094 = vrot.slane %v2088, 4
          %v2095 = vsel %vm434, %v2093, %v2094
          %v2096 = vrot.slane %v2089, 4
          %v2097 = vsel %vm434, %v2094, %v2096
          %2098 = vrot.lane.b32.xlu0 %v2095, 122
          %v2099 = vpop.permute.xlu0 %2098
          %2100 = vrot.lane.b32.xlu0 %v2097, 122
          %v2101 = vpop.permute.xlu0 %2100
          %v2104 = vadd.f32 %v2083, %v2099
          %v2105 = vadd.f32 %v2084, %v2101
          %s2106 = sld [smem:[#allocation3 + $0x53]]
          %v2107 = vstv %s2106
          %v2108 = vmul.f32 %v2107, %v304
          %v2109 = vmul.f32 %v2107, %v305
          %v2110 = vmul.f32 %v2107, %v306
          %v2114 = vrot.slane %v2108, 4
          %v2115 = vrot.slane %v2109, 4
          %v2116 = vsel %vm434, %v2114, %v2115
          %v2117 = vrot.slane %v2110, 4
          %v2118 = vsel %vm434, %v2115, %v2117
          %2119 = vrot.lane.b32.xlu0 %v2116, 122
          %v2120 = vpop.permute.xlu0 %2119
          %2121 = vrot.lane.b32.xlu0 %v2118, 122
          %v2122 = vpop.permute.xlu0 %2121
          %v2125 = vadd.f32 %v2104, %v2120
          %v2126 = vadd.f32 %v2105, %v2122
          %s2127 = sld [smem:[#allocation3 + $0x29]]
          %v2128 = vstv %s2127
          %v2129 = vmul.f32 %v2128, %v300
          %v2130 = vmul.f32 %v2128, %v301
          %v2131 = vmul.f32 %v2128, %v302
          %v2135 = vrot.slane %v2129, 5
          %v2136 = vrot.slane %v2130, 5
          %v2137 = vsel %vm469, %v2135, %v2136
          %v2138 = vrot.slane %v2131, 5
          %v2139 = vsel %vm469, %v2136, %v2138
          %2140 = vrot.lane.b32.xlu0 %v2137, 122
          %v2141 = vpop.permute.xlu0 %2140
          %2142 = vrot.lane.b32.xlu0 %v2139, 122
          %v2143 = vpop.permute.xlu0 %2142
          %v2146 = vadd.f32 %v2125, %v2141
          %v2147 = vadd.f32 %v2126, %v2143
          %s2148 = sld [smem:[#allocation3 + $0x5a]]
          %v2149 = vstv %s2148
          %v2150 = vmul.f32 %v2149, %v304
          %v2151 = vmul.f32 %v2149, %v305
          %v2152 = vmul.f32 %v2149, %v306
          %v2156 = vrot.slane %v2150, 5
          %v2157 = vrot.slane %v2151, 5
          %v2158 = vsel %vm469, %v2156, %v2157
          %v2159 = vrot.slane %v2152, 5
          %v2160 = vsel %vm469, %v2157, %v2159
          %2161 = vrot.lane.b32.xlu0 %v2158, 122
          %v2162 = vpop.permute.xlu0 %2161
          %2163 = vrot.lane.b32.xlu0 %v2160, 122
          %v2164 = vpop.permute.xlu0 %2163
          %v2167 = vadd.f32 %v2146, %v2162
          %v2168 = vadd.f32 %v2147, %v2164
          %s2169 = sld [smem:[#allocation3 + $0x30]]
          %v2170 = vstv %s2169
          %v2171 = vmul.f32 %v2170, %v300
          %v2172 = vmul.f32 %v2170, %v301
          %v2173 = vmul.f32 %v2170, %v302
          %v2177 = vrot.slane %v2171, 6
          %v2178 = vrot.slane %v2172, 6
          %v2179 = vsel %vm504, %v2177, %v2178
          %v2180 = vrot.slane %v2173, 6
          %v2181 = vsel %vm504, %v2178, %v2180
          %2182 = vrot.lane.b32.xlu0 %v2179, 122
          %v2183 = vpop.permute.xlu0 %2182
          %2184 = vrot.lane.b32.xlu0 %v2181, 122
          %v2185 = vpop.permute.xlu0 %2184
          %v2188 = vadd.f32 %v2167, %v2183
          %v2189 = vadd.f32 %v2168, %v2185
          %s2190 = sld [smem:[#allocation3 + $0x61]]
          %v2191 = vstv %s2190
          %v2192 = vmul.f32 %v2191, %v304
          %v2193 = vmul.f32 %v2191, %v305
          %v2194 = vmul.f32 %v2191, %v306
          %v2198 = vrot.slane %v2192, 6
          %v2199 = vrot.slane %v2193, 6
          %v2200 = vsel %vm504, %v2198, %v2199
          %v2201 = vrot.slane %v2194, 6
          %v2202 = vsel %vm504, %v2199, %v2201
          %2203 = vrot.lane.b32.xlu0 %v2200, 122
          %v2204 = vpop.permute.xlu0 %2203
          %2205 = vrot.lane.b32.xlu0 %v2202, 122
          %v2206 = vpop.permute.xlu0 %2205
          %v2209 = vadd.f32 %v2188, %v2204
          %v2210 = vadd.f32 %v2189, %v2206
          %v2211 = vxor.u32 %v2209, 2147483648
          %v2212 = vxor.u32 %v2210, 2147483648
          %v2213 = vmul.f32 %v2211, 1.442695
          %v2214 = vpow.pop %v2213
          %v2215 = vmul.f32 %v2212, 1.442695
          %v2216 = vpow.pop %v2215
          %v2217 = vadd.f32 %v2214, 1.0
          %v2218 = vadd.f32 %v2216, 1.0
          %v2219 = vrcp.pop %v2217
          %v2220 = vmul.f32 1.0, %v2219
          %v2221 = vrcp.pop %v2218
          %v2222 = vmul.f32 1.0, %v2221
          %2223 = vst.msk [vmem:[%s190] sm:$0xff] %vm200, %v2220
          %2224 = vst.msk [vmem:[%s190 + $0x8] sm:$0xff] %vm200, %v2222
        $region48: #{tpu_custom_call.1} parent=27 // pred_fallthru
          _
        %s2225 = sand.u32 %s89, 1
        %s2226 = scalar_lea.sflag [#allocation5], %s2225
        %s2227 = sand.u32 %s89, 1
        %s2228 = smul.addr %s2227, 16
        %s2229 = scalar_lea.vmem [#allocation8], %s2228
        // Predicated region
        $region49: #{tpu_custom_call.1} parent=27 // pred_check
          %p2230 = pneg %p99
        $region50: #{tpu_custom_call.1} parent=27 // pred_check_branch
          %2232 = sbr.rel (%p2230) target = $region52
        $region51: #{tpu_custom_call.1} parent=27 // pred_region
          %s2234 = ssub.s32 256, 256
          %2235 = vsyncadd %s2226, %s2234
          %s2236 = smul.addr %s24, 2
          %s2237 = smul.addr %s2236, 128
          %s2238 = scalar_lea.hbm %s2, %s2237
          %s2239 = sshll.u32 %s2229, 4
          %s2240 = int_to_ptr.vmem [resolvable:$true] %s2239
          %2245 = dma.vmem_to_hbm [thread:$0]  %s2240, 256, %s2238, %s2226, 128, 128, 8
        $region52: #{tpu_custom_call.1} parent=27 // pred_fallthru
          _
      $region28: #{tpu_custom_call.1} parent=5 // pred_fallthru
        _
      %p2246 = scmp.le.s32.totalorder 2, %s15
      // Predicated region
      $region53: #{tpu_custom_call.1} parent=5 // pred_check
        %p2247 = pneg %p2246
      $region54: #{tpu_custom_call.1} parent=5 // pred_check_branch
        %2249 = sbr.rel (%p2247) target = $region56
      $region55: #{tpu_custom_call.1} parent=5 // pred_region
        %s2250 = ssub.s32 %s15, 2
        // Predicated region
        $region57: #{tpu_custom_call.1} parent=55 // pred_check
          %p2251 = pneg %p105
        $region58: #{tpu_custom_call.1} parent=55 // pred_check_branch
          %2253 = sbr.rel (%p2251) target = $region60
        $region59: #{tpu_custom_call.1} parent=55 // pred_region
          %s2254 = sand.u32 %s90, 1
          %s2255 = scalar_lea.sflag [#allocation5], %s2254
          %s2256 = sand.u32 %s90, 1
          %s2257 = smul.addr %s2256, 16
          %s2258 = scalar_lea.vmem [#allocation8], %s2257
          %2259 = dma.done %s2255, 256
        $region60: #{tpu_custom_call.1} parent=55 // pred_fallthru
          _
      $region56: #{tpu_custom_call.1} parent=5 // pred_fallthru
        _
    $region6: #{tpu_custom_call.1} parent=1 // loop_footer
      %s19 = sadd.s32 1, %s15
    $region7: #{tpu_custom_call.1} parent=1 // loop_footer_branch
      %14 = sbr.rel target = $region3
    $region8: #{tpu_custom_call.1} parent=1 // loop_exit
      _
    %2260 = vsyncpa [#allocation4], 1
    %s2261 = scalar_lea.sflag [#allocation4], 1
    %2262 = vsyncpa %s2261, 1
    %2263 = vsyncpa [#allocation5], 1
    %s2264 = scalar_lea.sflag [#allocation5], 1
    %2265 = vsyncpa %s2264, 1
    %2266 = vsyncpa [#allocation6], 1
    %s2267 = scalar_lea.sflag [#allocation6], 1
    %2268 = vsyncpa %s2267, 1

</llo_original>
